<compile_context>
chip_gen: v5e
topology: v5e:2x2
jax: 0.10.0
libtpu: 0.0.40
codegen_flags: <defaults>
</compile_context>

<pallas_src>
import functools

import jax
import jax.numpy as jnp
from jax.experimental import pallas as pl
from jax.experimental.pallas import tpu as pltpu


# ---------------------------------------------------------------------------
# In-kernel helpers.
# ---------------------------------------------------------------------------
def _l2norm_bf16(z):
    # F.normalize(p=2, eps=1e-12): clamp the *squared* norm at eps**2 so zero
    # rows stay zero; cast to bf16 only for the MXU feed.
    ss = jnp.sum(z * z, axis=-1, keepdims=True)
    return (z * jax.lax.rsqrt(jnp.maximum(ss, 1e-24))).astype(jnp.bfloat16)


def _similarity(z):
    zn = _l2norm_bf16(z)
    return jax.lax.dot_general(zn, zn, (((1,), (1,)), ((), ())),
                               preferred_element_type=jnp.float32)


def _masked_softmax(scores):
    # `scores` already carries the additive -1e30 mask. Every row has a self
    # loop (add_self_loops), so the row max is finite and masked entries
    # underflow to 0.
    m = jnp.max(scores, axis=-1, keepdims=True)
    e = jnp.exp(scores - m)
    return e * pl.reciprocal(jnp.sum(e, axis=-1, keepdims=True), approx=True)


# ---------------------------------------------------------------------------
# Fused EnhancedTemporalGraphNetwork kernel (one graph per grid step).
# ---------------------------------------------------------------------------
def etgn_kernel(num_layers, N, H,
                betas_ref,                       # SMEM (9,) f32 AGNN betas
                x_ref, mask_ref,                 # (N, Din) f32, (N, N) additive mask
                w_in_ref, b_in_ref,              # input_transform (bf16 / f32)
                wb12_ref, b_beta_ref,            # [W_beta1; W_beta2] bf16, summed bias
                out_ref):                        # (N, 2H) f32: [h | c]
    mask1 = mask_ref[...]                        # (N, N)
    b_beta = b_beta_ref[...]                     # (1, H)

    def gate_scores(s, i0, i1, i2, i3):
        # (4N, N): forget / input / candidate / output rows, beta applied per
        # gate; only one mask copy ever lives in VMEM.
        return jnp.concatenate(
            [betas_ref[i0] * s + mask1, betas_ref[i1] * s + mask1,
             betas_ref[i2] * s + mask1, betas_ref[i3] * s + mask1], axis=0)

    # --- layer-invariant x branch: computed ONCE, shared by all layers ------
    x_t = jnp.dot(x_ref[...].astype(jnp.bfloat16), w_in_ref[...],
                  preferred_element_type=jnp.float32) + b_in_ref[...]
    x_t_b = x_t.astype(jnp.bfloat16)
    s_x = _similarity(x_t)                                           # (N, N)
    p_x = _masked_softmax(gate_scores(s_x, 1, 3, 5, 7)).astype(jnp.bfloat16)
    agg_x = jnp.dot(p_x, x_t_b, preferred_element_type=jnp.float32)  # (4N, H)

    h = None
    c = None
    for layer in range(num_layers):
        if layer == 0:
            # h_c is None => h = c = 0. agnn_hidden(0) = 0, so
            # predict_missing_info collapses to h_N = tanh(bb1 + bb2)
            # (the gamma branch multiplies zeros).
            h_N = jnp.broadcast_to(jnp.tanh(b_beta), (N, H))
        else:
            # h_N0 = agnn_hidden(h); h_N = h_N0 + predict_missing_info(h, h_N0)
            #      = h + tanh([h, h_N0] @ [W_beta1; W_beta2] + b)
            s_h = _similarity(h)
            p_h0 = _masked_softmax(betas_ref[0] * s_h + mask1).astype(jnp.bfloat16)
            h_N0 = jnp.dot(p_h0, h.astype(jnp.bfloat16),
                           preferred_element_type=jnp.float32)
            hc = jnp.concatenate([h, h_N0], axis=-1).astype(jnp.bfloat16)  # (N, 2H)
            beta_v = jnp.tanh(jnp.dot(hc, wb12_ref[...],
                                      preferred_element_type=jnp.float32) + b_beta)
            h_N = h + beta_v

        # --- 4 h-side AGNN convs: one batched softmax + one matmul ----------
        s_hn = _similarity(h_N)
        p_hn = _masked_softmax(gate_scores(s_hn, 2, 4, 6, 8)).astype(jnp.bfloat16)
        agg_h = jnp.dot(p_hn, h_N.astype(jnp.bfloat16),
                        preferred_element_type=jnp.float32)          # (4N, H)

        pre = agg_x + agg_h                                          # (4N, H)
        f = jax.nn.sigmoid(pre[0 * N:1 * N, :])
        i = jax.nn.sigmoid(pre[1 * N:2 * N, :])
        ct = jnp.tanh(pre[2 * N:3 * N, :])
        o = jax.nn.sigmoid(pre[3 * N:4 * N, :])

        c = i * ct if layer == 0 else f * c + i * ct
        h = o * jnp.tanh(c)

    # Single lane-dense slab write: [h | c].
    out_ref[...] = jnp.concatenate([h, c], axis=-1)


# ---------------------------------------------------------------------------
# Wrapper: adjacency / mask / weight prep (glue), one pallas_call over the
# batch of graphs, then edge-embedding gather (create_edge_embeddings).
# ---------------------------------------------------------------------------
def etgn_forward(params, x, edge_index, num_layers=2):
    """x: (B, N, Din) f32.  edge_index: (B, 2, E) int32 (row 0 = src, row 1 = dst)."""
    B, N, Din = x.shape
    H = params["w_in"].shape[1]

    # Dense adjacency mask per graph: adj[dst, src] = 1 for edge src -> dst,
    # with remove_self_loops + add_self_loops (PyG AGNNConv behavior).
    src, dst = edge_index[:, 0, :], edge_index[:, 1, :]
    keep = (src != dst).astype(jnp.float32)
    b_idx = jnp.arange(B)[:, None]
    adj = jnp.zeros((B, N, N), jnp.float32).at[b_idx, dst, src].set(keep)
    diag = jnp.arange(N)
    adj = adj.at[:, diag, diag].set(1.0)
    mask_add = jnp.where(adj > 0.0, 0.0, -1e30).astype(jnp.float32)  # (B, N, N)

    # Pre-cast / pre-fuse weights (bf16 MXU feed, f32 accumulation in-kernel).
    w_in_bf = params["w_in"].astype(jnp.bfloat16)
    wb12_bf = jnp.concatenate([params["wb1"], params["wb2"]],
                              axis=0).astype(jnp.bfloat16)            # (2H, H)
    b_beta = params["bb1"] + params["bb2"]                            # (1, H)
    betas = params["betas"].astype(jnp.float32)                       # (9,)

    def weight_spec(shape):
        return pl.BlockSpec(shape, lambda b, _s=shape: tuple(0 for _ in _s))

    out = pl.pallas_call(
        functools.partial(etgn_kernel, num_layers, N, H),
        grid=(B,),
        out_shape=jax.ShapeDtypeStruct((B, N, 2 * H), jnp.float32),
        in_specs=[
            pl.BlockSpec(memory_space=pltpu.MemorySpace.SMEM),        # betas (9,)
            pl.BlockSpec((None, N, Din), lambda b: (b, 0, 0)),        # x
            pl.BlockSpec((None, N, N), lambda b: (b, 0, 0)),          # additive mask
            weight_spec((Din, H)),                                    # w_in (bf16)
            weight_spec((1, H)),                                      # b_in
            weight_spec((2 * H, H)),                                  # [wb1; wb2] (bf16)
            weight_spec((1, H)),                                      # bb1 + bb2
        ],
        out_specs=pl.BlockSpec((None, N, 2 * H), lambda b: (b, 0, 0)),
        compiler_params=pltpu.CompilerParams(
            dimension_semantics=("parallel",),
            vmem_limit_bytes=32 * 1024 * 1024),
    )(betas, x, mask_add, w_in_bf, params["b_in"], wb12_bf, b_beta)

    h = out[..., :H]                                                  # (B, N, H)
    c = out[..., H:]                                                  # (B, N, H)

    # create_edge_embeddings: concat(src_emb, dst_emb) — gather stays in JAX.
    edge_emb = jnp.concatenate([h[b_idx, src], h[b_idx, dst]], axis=-1)
    return edge_emb, h, c, adj


# ---------------------------------------------------------------------------
# Pure-JAX reference (faithful to the PyTorch module, incl. the dead gamma
# branch) for correctness checking — per graph.
# ---------------------------------------------------------------------------
def _agnn_ref(z, adj, beta):
    norm = jnp.sqrt(jnp.sum(z * z, axis=-1, keepdims=True))
    zn = z / jnp.maximum(norm, 1e-12)
    s = beta * (zn @ zn.T)
    s = jnp.where(adj > 0.0, s, -1e30)
    s = s - jnp.max(s, axis=-1, keepdims=True)
    e = jnp.where(adj > 0.0, jnp.exp(s), 0.0)
    alpha = e / jnp.sum(e, axis=-1, keepdims=True)
    return alpha @ z


def mglstm_ref(p, x, adj, h_c):
    b = p["betas"]
    x_t = x @ p["w_in"] + p["b_in"]
    if h_c is None:
        h = jnp.zeros((x.shape[0], p["w_in"].shape[1]), jnp.float32)
        c = jnp.zeros_like(h)
    else:
        h, c = h_c
    h_N = _agnn_ref(h, adj, b[0])
    gamma = jnp.tanh(h @ p["wg1"] + p["bg1"] + h_N @ p["wg2"] + p["bg2"])
    beta_v = jnp.tanh(h @ p["wb1"] + p["bb1"] + h_N @ p["wb2"] + p["bb2"])
    r = jnp.zeros_like(h)
    m = h + (gamma + 1.0) * r + beta_v - h_N
    h_N = h_N + m
    f = jax.nn.sigmoid(_agnn_ref(x_t, adj, b[1]) + _agnn_ref(h_N, adj, b[2]))
    i = jax.nn.sigmoid(_agnn_ref(x_t, adj, b[3]) + _agnn_ref(h_N, adj, b[4]))
    ct = jnp.tanh(_agnn_ref(x_t, adj, b[5]) + _agnn_ref(h_N, adj, b[6]))
    c_new = f * c + i * ct
    o = jax.nn.sigmoid(_agnn_ref(x_t, adj, b[7]) + _agnn_ref(h_N, adj, b[8]))
    return o * jnp.tanh(c_new), c_new


def etgn_ref(p, x, adj, edge_index, num_layers=2):
    h_c = None
    for _ in range(num_layers):
        h, c = mglstm_ref(p, x, adj, h_c)
        h_c = (h, c)
    edge_emb = jnp.concatenate([h[edge_index[0]], h[edge_index[1]]], axis=1)
    return edge_emb, h, c


def init_params(key, input_dim, hidden_dim):
    ks = jax.random.split(key, 10)
    g = lambda k, shp: (0.1 * jax.random.normal(k, shp)).astype(jnp.float32)
    return {
        "w_in": g(ks[0], (input_dim, hidden_dim)),
        "b_in": g(ks[1], (1, hidden_dim)),
        # W_gamma1/2 are only used by the reference (dead in the forward output).
        "wg1": g(ks[2], (hidden_dim, hidden_dim)),
        "bg1": g(ks[3], (1, hidden_dim)),
        "wg2": g(ks[4], (hidden_dim, hidden_dim)),
        "bg2": g(ks[5], (1, hidden_dim)),
        "wb1": g(ks[6], (hidden_dim, hidden_dim)),
        "bb1": g(ks[7], (1, hidden_dim)),
        "wb2": g(ks[8], (hidden_dim, hidden_dim)),
        "bb2": g(ks[9], (1, hidden_dim)),
        # 9 AGNN betas in forward-use order:
        # hidden, forget_x, forget_h, input_x, input_h, cand_x, cand_h, out_x, out_h
        "betas": jnp.linspace(0.75, 1.25, 9).astype(jnp.float32),
    }


if __name__ == "__main__":
    B, N, D_IN, H, E, LAYERS = 4, 16, 8, 32, 48, 2

    key = jax.random.PRNGKey(0)
    k_x, k_e1, k_e2, k_p = jax.random.split(key, 4)

    x = jax.random.normal(k_x, (B, N, D_IN), dtype=jnp.float32)
    edge_index = jnp.stack([
        jax.random.randint(k_e1, (B, E), 0, N, dtype=jnp.int32),
        jax.random.randint(k_e2, (B, E), 0, N, dtype=jnp.int32),
    ], axis=1)                                                        # (B, 2, E)

    params = init_params(k_p, D_IN, H)

    edge_emb, h_new, c_new, adj = etgn_forward(params, x, edge_index, LAYERS)
    jax.block_until_ready((edge_emb, h_new, c_new))

    assert edge_emb.shape == (B, E, 2 * H)
    assert h_new.shape == (B, N, H) and c_new.shape == (B, N, H)
    assert bool(jnp.all(jnp.isfinite(edge_emb)))
    assert bool(jnp.all(jnp.isfinite(h_new))) and bool(jnp.all(jnp.isfinite(c_new)))

    # Per-graph pure-JAX reference (tolerance accounts for bf16 MXU operands
    # and the EUP approximate reciprocal / rsqrt paths).
    ok = True
    for b in range(B):
        e_ref, h_ref, c_ref = etgn_ref(params, x[b], adj[b], edge_index[b], LAYERS)
        ok &= bool(jnp.allclose(h_new[b], h_ref, rtol=2e-2, atol=2e-2))
        ok &= bool(jnp.allclose(c_new[b], c_ref, rtol=2e-2, atol=2e-2))
        ok &= bool(jnp.allclose(edge_emb[b], e_ref, rtol=2e-2, atol=2e-2))
    assert ok

    print("KERNEL_OK")
</pallas_src>

<mosaic_0001>
module attributes {stable_mosaic.version = 11 : i64} {
  func.func @etgn_kernel(%arg0: i32, %arg1: memref<9xf32, #tpu.memory_space<smem>>, %arg2: memref<1x16x8xf32, #tpu.memory_space<vmem>>, %arg3: memref<1x16x16xf32, #tpu.memory_space<vmem>>, %arg4: memref<8x32xbf16, #tpu.memory_space<vmem>>, %arg5: memref<1x32xf32, #tpu.memory_space<vmem>>, %arg6: memref<64x32xbf16, #tpu.memory_space<vmem>>, %arg7: memref<1x32xf32, #tpu.memory_space<vmem>>, %arg8: memref<1x16x64xf32, #tpu.memory_space<vmem>>) attributes {dimension_semantics = [#tpu.dimension_semantics<parallel>], iteration_bounds = array<i64: 4>, scalar_prefetch = 0 : i64, scratch_operands = 0 : i64, tpu.core_type = #tpu.core_type<tc>, window_params = [{transform_indices = @transform_0, window_bounds = array<i64: 9>}, {transform_indices = @transform_1, window_bounds = array<i64: 1, 16, 8>}, {transform_indices = @transform_2, window_bounds = array<i64: 1, 16, 16>}, {pipeline_mode = #tpu.pipeline_mode<synchronous>, transform_indices = @transform_3, window_bounds = array<i64: 8, 32>}, {pipeline_mode = #tpu.pipeline_mode<synchronous>, transform_indices = @transform_4, window_bounds = array<i64: 1, 32>}, {pipeline_mode = #tpu.pipeline_mode<synchronous>, transform_indices = @transform_5, window_bounds = array<i64: 64, 32>}, {pipeline_mode = #tpu.pipeline_mode<synchronous>, transform_indices = @transform_6, window_bounds = array<i64: 1, 32>}, {transform_indices = @transform_7, window_bounds = array<i64: 1, 16, 64>}]} {
    %c0 = arith.constant 0 : index
    %c0_0 = arith.constant 0 : index
    %c0_1 = arith.constant 0 : index
    %0 = vector.load %arg3[%c0, %c0_0, %c0_1] : memref<1x16x16xf32, #tpu.memory_space<vmem>>, vector<1x16x16xf32>
    %1 = vector.shape_cast %0 : vector<1x16x16xf32> to vector<16x16xf32>
    %c0_2 = arith.constant 0 : index
    %c0_3 = arith.constant 0 : index
    %2 = vector.load %arg7[%c0_2, %c0_3] : memref<1x32xf32, #tpu.memory_space<vmem>>, vector<1x32xf32>
    %c0_4 = arith.constant 0 : index
    %c0_5 = arith.constant 0 : index
    %c0_6 = arith.constant 0 : index
    %3 = vector.load %arg2[%c0_4, %c0_5, %c0_6] : memref<1x16x8xf32, #tpu.memory_space<vmem>>, vector<1x16x8xf32>
    %4 = vector.shape_cast %3 : vector<1x16x8xf32> to vector<16x8xf32>
    %5 = arith.truncf %4 : vector<16x8xf32> to vector<16x8xbf16>
    %c0_7 = arith.constant 0 : index
    %c0_8 = arith.constant 0 : index
    %6 = vector.load %arg4[%c0_7, %c0_8] : memref<8x32xbf16, #tpu.memory_space<vmem>>, vector<8x32xbf16>
    %cst = arith.constant dense<0.000000e+00> : vector<16x32xf32>
    %7 = tpu.matmul %5, %6, %cst {dimension_numbers = #tpu.dot_dimension_numbers<[1], [0], [0], [1], [0, 0, 1, 1], [], []>} : vector<16x8xbf16>, vector<8x32xbf16>, vector<16x32xf32> -> vector<16x32xf32>
    %c0_9 = arith.constant 0 : index
    %c0_10 = arith.constant 0 : index
    %8 = vector.load %arg5[%c0_9, %c0_10] : memref<1x32xf32, #tpu.memory_space<vmem>>, vector<1x32xf32>
    %9 = vector.broadcast %8 : vector<1x32xf32> to vector<16x32xf32>
    %10 = arith.addf %7, %9 : vector<16x32xf32>
    %11 = arith.truncf %10 : vector<16x32xf32> to vector<16x32xbf16>
    %12 = arith.mulf %10, %10 : vector<16x32xf32>
    %cst_11 = arith.constant dense<0.000000e+00> : vector<16xf32>
    %13 = vector.multi_reduction <add>, %12, %cst_11 [1] : vector<16x32xf32> to vector<16xf32>
    %14 = vector.shape_cast %13 : vector<16xf32> to vector<16x1xf32>
    %cst_12 = arith.constant 1.000000e-24 : f32
    %15 = vector.broadcast %cst_12 : f32 to vector<16x1xf32>
    %16 = arith.maximumf %14, %15 : vector<16x1xf32>
    %17 = math.rsqrt %16 : vector<16x1xf32>
    %18 = vector.broadcast %17 : vector<16x1xf32> to vector<16x32xf32>
    %19 = arith.mulf %10, %18 : vector<16x32xf32>
    %20 = arith.truncf %19 : vector<16x32xf32> to vector<16x32xbf16>
    %cst_13 = arith.constant dense<0.000000e+00> : vector<16x16xf32>
    %21 = tpu.matmul %20, %20, %cst_13 {dimension_numbers = #tpu.dot_dimension_numbers<[1], [1], [0], [0], [0, 0, 1, 0], [], []>} : vector<16x32xbf16>, vector<16x32xbf16>, vector<16x16xf32> -> vector<16x16xf32>
    %c1 = arith.constant 1 : index
    %22 = memref.load %arg1[%c1] : memref<9xf32, #tpu.memory_space<smem>>
    %23 = vector.broadcast %22 : f32 to vector<16x16xf32>
    %24 = arith.mulf %23, %21 : vector<16x16xf32>
    %25 = arith.addf %24, %1 : vector<16x16xf32>
    %c3 = arith.constant 3 : index
    %26 = memref.load %arg1[%c3] : memref<9xf32, #tpu.memory_space<smem>>
    %27 = vector.broadcast %26 : f32 to vector<16x16xf32>
    %28 = arith.mulf %27, %21 : vector<16x16xf32>
    %29 = arith.addf %28, %1 : vector<16x16xf32>
    %c5 = arith.constant 5 : index
    %30 = memref.load %arg1[%c5] : memref<9xf32, #tpu.memory_space<smem>>
    %31 = vector.broadcast %30 : f32 to vector<16x16xf32>
    %32 = arith.mulf %31, %21 : vector<16x16xf32>
    %33 = arith.addf %32, %1 : vector<16x16xf32>
    %c7 = arith.constant 7 : index
    %34 = memref.load %arg1[%c7] : memref<9xf32, #tpu.memory_space<smem>>
    %35 = vector.broadcast %34 : f32 to vector<16x16xf32>
    %36 = arith.mulf %35, %21 : vector<16x16xf32>
    %37 = arith.addf %36, %1 : vector<16x16xf32>
    %38 = tpu.concatenate %25, %29, %33, %37 in 0 : vector<16x16xf32>, vector<16x16xf32>, vector<16x16xf32>, vector<16x16xf32> -> vector<64x16xf32>
    %cst_14 = arith.constant dense<0xFF800000> : vector<64xf32>
    %39 = vector.multi_reduction <maximumf>, %38, %cst_14 [1] : vector<64x16xf32> to vector<64xf32>
    %40 = vector.shape_cast %39 : vector<64xf32> to vector<64x1xf32>
    %41 = vector.broadcast %40 : vector<64x1xf32> to vector<64x16xf32>
    %42 = arith.subf %38, %41 : vector<64x16xf32>
    %43 = math.exp %42 : vector<64x16xf32>
    %cst_15 = arith.constant dense<0.000000e+00> : vector<64xf32>
    %44 = vector.multi_reduction <add>, %43, %cst_15 [1] : vector<64x16xf32> to vector<64xf32>
    %45 = vector.shape_cast %44 : vector<64xf32> to vector<64x1xf32>
    %46 = tpu.reciprocal %45 {approx = true} : vector<64x1xf32> -> vector<64x1xf32>
    %47 = vector.broadcast %46 : vector<64x1xf32> to vector<64x16xf32>
    %48 = arith.mulf %43, %47 : vector<64x16xf32>
    %49 = arith.truncf %48 : vector<64x16xf32> to vector<64x16xbf16>
    %cst_16 = arith.constant dense<0.000000e+00> : vector<64x32xf32>
    %50 = tpu.matmul %49, %11, %cst_16 {dimension_numbers = #tpu.dot_dimension_numbers<[1], [0], [0], [1], [0, 0, 1, 1], [], []>} : vector<64x16xbf16>, vector<16x32xbf16>, vector<64x32xf32> -> vector<64x32xf32>
    %51 = math.tanh %2 : vector<1x32xf32>
    %52 = vector.shape_cast %51 : vector<1x32xf32> to vector<1x32xf32>
    %53 = vector.broadcast %52 : vector<1x32xf32> to vector<16x32xf32>
    %54 = arith.mulf %53, %53 : vector<16x32xf32>
    %cst_17 = arith.constant dense<0.000000e+00> : vector<16xf32>
    %55 = vector.multi_reduction <add>, %54, %cst_17 [1] : vector<16x32xf32> to vector<16xf32>
    %56 = vector.shape_cast %55 : vector<16xf32> to vector<16x1xf32>
    %cst_18 = arith.constant 1.000000e-24 : f32
    %57 = vector.broadcast %cst_18 : f32 to vector<16x1xf32>
    %58 = arith.maximumf %56, %57 : vector<16x1xf32>
    %59 = math.rsqrt %58 : vector<16x1xf32>
    %60 = vector.broadcast %59 : vector<16x1xf32> to vector<16x32xf32>
    %61 = arith.mulf %53, %60 : vector<16x32xf32>
    %62 = arith.truncf %61 : vector<16x32xf32> to vector<16x32xbf16>
    %cst_19 = arith.constant dense<0.000000e+00> : vector<16x16xf32>
    %63 = tpu.matmul %62, %62, %cst_19 {dimension_numbers = #tpu.dot_dimension_numbers<[1], [1], [0], [0], [0, 0, 1, 0], [], []>} : vector<16x32xbf16>, vector<16x32xbf16>, vector<16x16xf32> -> vector<16x16xf32>
    %c2 = arith.constant 2 : index
    %64 = memref.load %arg1[%c2] : memref<9xf32, #tpu.memory_space<smem>>
    %65 = vector.broadcast %64 : f32 to vector<16x16xf32>
    %66 = arith.mulf %65, %63 : vector<16x16xf32>
    %67 = arith.addf %66, %1 : vector<16x16xf32>
    %c4 = arith.constant 4 : index
    %68 = memref.load %arg1[%c4] : memref<9xf32, #tpu.memory_space<smem>>
    %69 = vector.broadcast %68 : f32 to vector<16x16xf32>
    %70 = arith.mulf %69, %63 : vector<16x16xf32>
    %71 = arith.addf %70, %1 : vector<16x16xf32>
    %c6 = arith.constant 6 : index
    %72 = memref.load %arg1[%c6] : memref<9xf32, #tpu.memory_space<smem>>
    %73 = vector.broadcast %72 : f32 to vector<16x16xf32>
    %74 = arith.mulf %73, %63 : vector<16x16xf32>
    %75 = arith.addf %74, %1 : vector<16x16xf32>
    %c8 = arith.constant 8 : index
    %76 = memref.load %arg1[%c8] : memref<9xf32, #tpu.memory_space<smem>>
    %77 = vector.broadcast %76 : f32 to vector<16x16xf32>
    %78 = arith.mulf %77, %63 : vector<16x16xf32>
    %79 = arith.addf %78, %1 : vector<16x16xf32>
    %80 = tpu.concatenate %67, %71, %75, %79 in 0 : vector<16x16xf32>, vector<16x16xf32>, vector<16x16xf32>, vector<16x16xf32> -> vector<64x16xf32>
    %cst_20 = arith.constant dense<0xFF800000> : vector<64xf32>
    %81 = vector.multi_reduction <maximumf>, %80, %cst_20 [1] : vector<64x16xf32> to vector<64xf32>
    %82 = vector.shape_cast %81 : vector<64xf32> to vector<64x1xf32>
    %83 = vector.broadcast %82 : vector<64x1xf32> to vector<64x16xf32>
    %84 = arith.subf %80, %83 : vector<64x16xf32>
    %85 = math.exp %84 : vector<64x16xf32>
    %cst_21 = arith.constant dense<0.000000e+00> : vector<64xf32>
    %86 = vector.multi_reduction <add>, %85, %cst_21 [1] : vector<64x16xf32> to vector<64xf32>
    %87 = vector.shape_cast %86 : vector<64xf32> to vector<64x1xf32>
    %88 = tpu.reciprocal %87 {approx = true} : vector<64x1xf32> -> vector<64x1xf32>
    %89 = vector.broadcast %88 : vector<64x1xf32> to vector<64x16xf32>
    %90 = arith.mulf %85, %89 : vector<64x16xf32>
    %91 = arith.truncf %90 : vector<64x16xf32> to vector<64x16xbf16>
    %92 = arith.truncf %53 : vector<16x32xf32> to vector<16x32xbf16>
    %cst_22 = arith.constant dense<0.000000e+00> : vector<64x32xf32>
    %93 = tpu.matmul %91, %92, %cst_22 {dimension_numbers = #tpu.dot_dimension_numbers<[1], [0], [0], [1], [0, 0, 1, 1], [], []>} : vector<64x16xbf16>, vector<16x32xbf16>, vector<64x32xf32> -> vector<64x32xf32>
    %94 = arith.addf %50, %93 : vector<64x32xf32>
    %95 = vector.extract_strided_slice %94 {offsets = [16, 0], sizes = [16, 32], strides = [1, 1]} : vector<64x32xf32> to vector<16x32xf32>
    %96 = arith.negf %95 : vector<16x32xf32>
    %97 = math.exp %96 : vector<16x32xf32>
    %cst_23 = arith.constant 1.000000e+00 : f32
    %98 = vector.broadcast %cst_23 : f32 to vector<16x32xf32>
    %99 = arith.addf %98, %97 : vector<16x32xf32>
    %100 = arith.divf %98, %99 : vector<16x32xf32>
    %101 = vector.extract_strided_slice %94 {offsets = [32, 0], sizes = [16, 32], strides = [1, 1]} : vector<64x32xf32> to vector<16x32xf32>
    %102 = math.tanh %101 : vector<16x32xf32>
    %103 = vector.extract_strided_slice %94 {offsets = [48, 0], sizes = [16, 32], strides = [1, 1]} : vector<64x32xf32> to vector<16x32xf32>
    %104 = arith.negf %103 : vector<16x32xf32>
    %105 = math.exp %104 : vector<16x32xf32>
    %cst_24 = arith.constant 1.000000e+00 : f32
    %106 = vector.broadcast %cst_24 : f32 to vector<16x32xf32>
    %107 = arith.addf %106, %105 : vector<16x32xf32>
    %108 = arith.divf %106, %107 : vector<16x32xf32>
    %109 = arith.mulf %100, %102 : vector<16x32xf32>
    %110 = math.tanh %109 : vector<16x32xf32>
    %111 = arith.mulf %108, %110 : vector<16x32xf32>
    %112 = arith.mulf %111, %111 : vector<16x32xf32>
    %cst_25 = arith.constant dense<0.000000e+00> : vector<16xf32>
    %113 = vector.multi_reduction <add>, %112, %cst_25 [1] : vector<16x32xf32> to vector<16xf32>
    %114 = vector.shape_cast %113 : vector<16xf32> to vector<16x1xf32>
    %cst_26 = arith.constant 1.000000e-24 : f32
    %115 = vector.broadcast %cst_26 : f32 to vector<16x1xf32>
    %116 = arith.maximumf %114, %115 : vector<16x1xf32>
    %117 = math.rsqrt %116 : vector<16x1xf32>
    %118 = vector.broadcast %117 : vector<16x1xf32> to vector<16x32xf32>
    %119 = arith.mulf %111, %118 : vector<16x32xf32>
    %120 = arith.truncf %119 : vector<16x32xf32> to vector<16x32xbf16>
    %cst_27 = arith.constant dense<0.000000e+00> : vector<16x16xf32>
    %121 = tpu.matmul %120, %120, %cst_27 {dimension_numbers = #tpu.dot_dimension_numbers<[1], [1], [0], [0], [0, 0, 1, 0], [], []>} : vector<16x32xbf16>, vector<16x32xbf16>, vector<16x16xf32> -> vector<16x16xf32>
    %c0_28 = arith.constant 0 : index
    %122 = memref.load %arg1[%c0_28] : memref<9xf32, #tpu.memory_space<smem>>
    %123 = vector.broadcast %122 : f32 to vector<16x16xf32>
    %124 = arith.mulf %123, %121 : vector<16x16xf32>
    %125 = arith.addf %124, %1 : vector<16x16xf32>
    %cst_29 = arith.constant dense<0xFF800000> : vector<16xf32>
    %126 = vector.multi_reduction <maximumf>, %125, %cst_29 [1] : vector<16x16xf32> to vector<16xf32>
    %127 = vector.shape_cast %126 : vector<16xf32> to vector<16x1xf32>
    %128 = vector.broadcast %127 : vector<16x1xf32> to vector<16x16xf32>
    %129 = arith.subf %125, %128 : vector<16x16xf32>
    %130 = math.exp %129 : vector<16x16xf32>
    %cst_30 = arith.constant dense<0.000000e+00> : vector<16xf32>
    %131 = vector.multi_reduction <add>, %130, %cst_30 [1] : vector<16x16xf32> to vector<16xf32>
    %132 = vector.shape_cast %131 : vector<16xf32> to vector<16x1xf32>
    %133 = tpu.reciprocal %132 {approx = true} : vector<16x1xf32> -> vector<16x1xf32>
    %134 = vector.broadcast %133 : vector<16x1xf32> to vector<16x16xf32>
    %135 = arith.mulf %130, %134 : vector<16x16xf32>
    %136 = arith.truncf %135 : vector<16x16xf32> to vector<16x16xbf16>
    %137 = arith.truncf %111 : vector<16x32xf32> to vector<16x32xbf16>
    %cst_31 = arith.constant dense<0.000000e+00> : vector<16x32xf32>
    %138 = tpu.matmul %136, %137, %cst_31 {dimension_numbers = #tpu.dot_dimension_numbers<[1], [0], [0], [1], [0, 0, 1, 1], [], []>} : vector<16x16xbf16>, vector<16x32xbf16>, vector<16x32xf32> -> vector<16x32xf32>
    %139 = tpu.concatenate %111, %138 in 1 : vector<16x32xf32>, vector<16x32xf32> -> vector<16x64xf32>
    %140 = arith.truncf %139 : vector<16x64xf32> to vector<16x64xbf16>
    %c0_32 = arith.constant 0 : index
    %c0_33 = arith.constant 0 : index
    %141 = vector.load %arg6[%c0_32, %c0_33] : memref<64x32xbf16, #tpu.memory_space<vmem>>, vector<64x32xbf16>
    %cst_34 = arith.constant dense<0.000000e+00> : vector<16x32xf32>
    %142 = tpu.matmul %140, %141, %cst_34 {dimension_numbers = #tpu.dot_dimension_numbers<[1], [0], [0], [1], [0, 0, 1, 1], [], []>} : vector<16x64xbf16>, vector<64x32xbf16>, vector<16x32xf32> -> vector<16x32xf32>
    %143 = vector.broadcast %2 : vector<1x32xf32> to vector<16x32xf32>
    %144 = arith.addf %142, %143 : vector<16x32xf32>
    %145 = math.tanh %144 : vector<16x32xf32>
    %146 = arith.addf %111, %145 : vector<16x32xf32>
    %147 = arith.mulf %146, %146 : vector<16x32xf32>
    %cst_35 = arith.constant dense<0.000000e+00> : vector<16xf32>
    %148 = vector.multi_reduction <add>, %147, %cst_35 [1] : vector<16x32xf32> to vector<16xf32>
    %149 = vector.shape_cast %148 : vector<16xf32> to vector<16x1xf32>
    %cst_36 = arith.constant 1.000000e-24 : f32
    %150 = vector.broadcast %cst_36 : f32 to vector<16x1xf32>
    %151 = arith.maximumf %149, %150 : vector<16x1xf32>
    %152 = math.rsqrt %151 : vector<16x1xf32>
    %153 = vector.broadcast %152 : vector<16x1xf32> to vector<16x32xf32>
    %154 = arith.mulf %146, %153 : vector<16x32xf32>
    %155 = arith.truncf %154 : vector<16x32xf32> to vector<16x32xbf16>
    %cst_37 = arith.constant dense<0.000000e+00> : vector<16x16xf32>
    %156 = tpu.matmul %155, %155, %cst_37 {dimension_numbers = #tpu.dot_dimension_numbers<[1], [1], [0], [0], [0, 0, 1, 0], [], []>} : vector<16x32xbf16>, vector<16x32xbf16>, vector<16x16xf32> -> vector<16x16xf32>
    %c2_38 = arith.constant 2 : index
    %157 = memref.load %arg1[%c2_38] : memref<9xf32, #tpu.memory_space<smem>>
    %158 = vector.broadcast %157 : f32 to vector<16x16xf32>
    %159 = arith.mulf %158, %156 : vector<16x16xf32>
    %160 = arith.addf %159, %1 : vector<16x16xf32>
    %c4_39 = arith.constant 4 : index
    %161 = memref.load %arg1[%c4_39] : memref<9xf32, #tpu.memory_space<smem>>
    %162 = vector.broadcast %161 : f32 to vector<16x16xf32>
    %163 = arith.mulf %162, %156 : vector<16x16xf32>
    %164 = arith.addf %163, %1 : vector<16x16xf32>
    %c6_40 = arith.constant 6 : index
    %165 = memref.load %arg1[%c6_40] : memref<9xf32, #tpu.memory_space<smem>>
    %166 = vector.broadcast %165 : f32 to vector<16x16xf32>
    %167 = arith.mulf %166, %156 : vector<16x16xf32>
    %168 = arith.addf %167, %1 : vector<16x16xf32>
    %c8_41 = arith.constant 8 : index
    %169 = memref.load %arg1[%c8_41] : memref<9xf32, #tpu.memory_space<smem>>
    %170 = vector.broadcast %169 : f32 to vector<16x16xf32>
    %171 = arith.mulf %170, %156 : vector<16x16xf32>
    %172 = arith.addf %171, %1 : vector<16x16xf32>
    %173 = tpu.concatenate %160, %164, %168, %172 in 0 : vector<16x16xf32>, vector<16x16xf32>, vector<16x16xf32>, vector<16x16xf32> -> vector<64x16xf32>
    %cst_42 = arith.constant dense<0xFF800000> : vector<64xf32>
    %174 = vector.multi_reduction <maximumf>, %173, %cst_42 [1] : vector<64x16xf32> to vector<64xf32>
    %175 = vector.shape_cast %174 : vector<64xf32> to vector<64x1xf32>
    %176 = vector.broadcast %175 : vector<64x1xf32> to vector<64x16xf32>
    %177 = arith.subf %173, %176 : vector<64x16xf32>
    %178 = math.exp %177 : vector<64x16xf32>
    %cst_43 = arith.constant dense<0.000000e+00> : vector<64xf32>
    %179 = vector.multi_reduction <add>, %178, %cst_43 [1] : vector<64x16xf32> to vector<64xf32>
    %180 = vector.shape_cast %179 : vector<64xf32> to vector<64x1xf32>
    %181 = tpu.reciprocal %180 {approx = true} : vector<64x1xf32> -> vector<64x1xf32>
    %182 = vector.broadcast %181 : vector<64x1xf32> to vector<64x16xf32>
    %183 = arith.mulf %178, %182 : vector<64x16xf32>
    %184 = arith.truncf %183 : vector<64x16xf32> to vector<64x16xbf16>
    %185 = arith.truncf %146 : vector<16x32xf32> to vector<16x32xbf16>
    %cst_44 = arith.constant dense<0.000000e+00> : vector<64x32xf32>
    %186 = tpu.matmul %184, %185, %cst_44 {dimension_numbers = #tpu.dot_dimension_numbers<[1], [0], [0], [1], [0, 0, 1, 1], [], []>} : vector<64x16xbf16>, vector<16x32xbf16>, vector<64x32xf32> -> vector<64x32xf32>
    %187 = arith.addf %50, %186 : vector<64x32xf32>
    %188 = vector.extract_strided_slice %187 {offsets = [0, 0], sizes = [16, 32], strides = [1, 1]} : vector<64x32xf32> to vector<16x32xf32>
    %189 = arith.negf %188 : vector<16x32xf32>
    %190 = math.exp %189 : vector<16x32xf32>
    %cst_45 = arith.constant 1.000000e+00 : f32
    %191 = vector.broadcast %cst_45 : f32 to vector<16x32xf32>
    %192 = arith.addf %191, %190 : vector<16x32xf32>
    %193 = arith.divf %191, %192 : vector<16x32xf32>
    %194 = vector.extract_strided_slice %187 {offsets = [16, 0], sizes = [16, 32], strides = [1, 1]} : vector<64x32xf32> to vector<16x32xf32>
    %195 = arith.negf %194 : vector<16x32xf32>
    %196 = math.exp %195 : vector<16x32xf32>
    %cst_46 = arith.constant 1.000000e+00 : f32
    %197 = vector.broadcast %cst_46 : f32 to vector<16x32xf32>
    %198 = arith.addf %197, %196 : vector<16x32xf32>
    %199 = arith.divf %197, %198 : vector<16x32xf32>
    %200 = vector.extract_strided_slice %187 {offsets = [32, 0], sizes = [16, 32], strides = [1, 1]} : vector<64x32xf32> to vector<16x32xf32>
    %201 = math.tanh %200 : vector<16x32xf32>
    %202 = vector.extract_strided_slice %187 {offsets = [48, 0], sizes = [16, 32], strides = [1, 1]} : vector<64x32xf32> to vector<16x32xf32>
    %203 = arith.negf %202 : vector<16x32xf32>
    %204 = math.exp %203 : vector<16x32xf32>
    %cst_47 = arith.constant 1.000000e+00 : f32
    %205 = vector.broadcast %cst_47 : f32 to vector<16x32xf32>
    %206 = arith.addf %205, %204 : vector<16x32xf32>
    %207 = arith.divf %205, %206 : vector<16x32xf32>
    %208 = arith.mulf %193, %109 : vector<16x32xf32>
    %209 = arith.mulf %199, %201 : vector<16x32xf32>
    %210 = arith.addf %208, %209 : vector<16x32xf32>
    %211 = math.tanh %210 : vector<16x32xf32>
    %212 = arith.mulf %207, %211 : vector<16x32xf32>
    %213 = tpu.concatenate %212, %210 in 1 : vector<16x32xf32>, vector<16x32xf32> -> vector<16x64xf32>
    %c0_48 = arith.constant 0 : index
    %c0_49 = arith.constant 0 : index
    %c0_50 = arith.constant 0 : index
    %214 = vector.load %arg8[%c0_48, %c0_49, %c0_50] : memref<1x16x64xf32, #tpu.memory_space<vmem>>, vector<1x16x64xf32>
    %215 = vector.shape_cast %214 : vector<1x16x64xf32> to vector<16x64xf32>
    %216 = vector.shape_cast %213 : vector<16x64xf32> to vector<1x16x64xf32>
    tpu.vector_store %arg8[%c0_48, %c0_49, %c0_50], %216 {strides = array<i32>} : memref<1x16x64xf32, #tpu.memory_space<vmem>>, vector<1x16x64xf32>,
    return
  }
  func.func @transform_0(%arg0: i32) -> i32 {
    %c0_i32 = arith.constant 0 : i32
    %c0_i32_0 = arith.constant 0 : i32
    return %c0_i32 : i32
  }
  func.func @transform_1(%arg0: i32) -> (i32, i32, i32) {
    %c0_i32 = arith.constant 0 : i32
    %c0_i32_0 = arith.constant 0 : i32
    %c0_i32_1 = arith.constant 0 : i32
    return %arg0, %c0_i32, %c0_i32_0 : i32, i32, i32
  }
  func.func @transform_2(%arg0: i32) -> (i32, i32, i32) {
    %c0_i32 = arith.constant 0 : i32
    %c0_i32_0 = arith.constant 0 : i32
    %c0_i32_1 = arith.constant 0 : i32
    return %arg0, %c0_i32, %c0_i32_0 : i32, i32, i32
  }
  func.func @transform_3(%arg0: i32) -> (i32, i32) {
    %c0_i32 = arith.constant 0 : i32
    %c0_i32_0 = arith.constant 0 : i32
    %c0_i32_1 = arith.constant 0 : i32
    return %c0_i32, %c0_i32_0 : i32, i32
  }
  func.func @transform_4(%arg0: i32) -> (i32, i32) {
    %c0_i32 = arith.constant 0 : i32
    %c0_i32_0 = arith.constant 0 : i32
    %c0_i32_1 = arith.constant 0 : i32
    return %c0_i32, %c0_i32_0 : i32, i32
  }
  func.func @transform_5(%arg0: i32) -> (i32, i32) {
    %c0_i32 = arith.constant 0 : i32
    %c0_i32_0 = arith.constant 0 : i32
    %c0_i32_1 = arith.constant 0 : i32
    return %c0_i32, %c0_i32_0 : i32, i32
  }
  func.func @transform_6(%arg0: i32) -> (i32, i32) {
    %c0_i32 = arith.constant 0 : i32
    %c0_i32_0 = arith.constant 0 : i32
    %c0_i32_1 = arith.constant 0 : i32
    return %c0_i32, %c0_i32_0 : i32, i32
  }
  func.func @transform_7(%arg0: i32) -> (i32, i32, i32) {
    %c0_i32 = arith.constant 0 : i32
    %c0_i32_0 = arith.constant 0 : i32
    %c0_i32_1 = arith.constant 0 : i32
    return %arg0, %c0_i32, %c0_i32_0 : i32, i32, i32
  }
}

</mosaic_0001>

<llo_original>
// kernel: tpu_custom_call.1
$region0: #{tpu_custom_call.1}
  #allocation0 [shape = 'u32[]', space=smem, size = 0x4, offset = 0x4, fixed_abs, tag = 'smem constant byte address 0x4 - core index']
  #allocation1 [shape = 'u32[72,128]{1,0:T(1,128)}', space=vmem, size = 0x9000, scoped, tag = 'internal scratch']
  %s0 = inlined_call_operand.vmem [shape: f32[9], index: 0, kind: input, shape index: {}]
  %s1 = inlined_call_operand.vmem [shape: f32[4,16,8], index: 1, kind: input, shape index: {}]
  %s2 = inlined_call_operand.vmem [shape: f32[4,16,16], index: 2, kind: input, shape index: {}]
  %s3 = inlined_call_operand.vmem [shape: bf16[8,32], index: 3, kind: input, shape index: {}]
  %s4 = inlined_call_operand.vmem [shape: f32[1,32], index: 4, kind: input, shape index: {}]
  %s5 = inlined_call_operand.vmem [shape: bf16[64,32], index: 5, kind: input, shape index: {}]
  %s6 = inlined_call_operand.vmem [shape: f32[1,32], index: 6, kind: input, shape index: {}]
  %s7 = inlined_call_operand.hbm [shape: f32[4,16,64], index: 7, kind: output, shape index: {}]
  %s8 = sld [smem:[#allocation0]]
  $region65: #{tpu_custom_call.1} parent=0
    _
  %s10 = ssub.s32 1, %s8
  %s11 = scalar_select 0, %s10, %s8
  $region1: #{tpu_custom_call.1} parent=0
    #allocation2 [shape = 'u8[512]{0}', space=smem, size = 0x200, scoped, tag = 'input window, operand 0, single buffered']
    #allocation3 [shape = 's32[2]{0}', space=sflag, size = 0x8, scoped, tag = 'scoped memory for tpu_custom_call.1']
    #allocation4 [shape = 's32[2]{0}', space=sflag, size = 0x8, scoped, tag = 'scoped memory for tpu_custom_call.1']
    #allocation5 [shape = 'u8[16384]{0}', space=vmem, size = 0x4000, scoped, tag = 'output window, operand 0']
    %12 = vsyncpa [#allocation4], 0
    %13 = vsyncpa [#allocation3], 0
    %s14 = scalar_lea.sflag [#allocation3], 1
    %15 = vsyncpa %s14, 0
    loop: start=0, step=1, limit=6
    $region2: #{tpu_custom_call.1} parent=1 // loop_pre_header
      _
    $region3: #{tpu_custom_call.1} parent=1 // loop_header
      %s17 = sphi 0, %s21
      %p18 = scmp.ge.s32.totalorder %s17, 6
      %s25 = sphi 0, %s25
      %s27 = sphi 0, %s25
      %s28 = sphi 0, %s27
      %s42 = sphi 0, %s28
      %s48 = sphi 0, %s50
      %s51 = sphi 0, %s48
      %s52 = sphi 0, %s51
      %s68 = sphi 0, %s52
      %s74 = sphi 0, %s76
      %s77 = sphi 0, %s74
      %s78 = sphi 0, %s77
      %s94 = sphi 0, %s78
      %s98 = sphi 0, %s98
      %s100 = sphi 0, %s98
      %s101 = sphi 0, %s100
      %s115 = sphi 0, %s101
      %s119 = sphi 0, %s119
      %s121 = sphi 0, %s119
      %s122 = sphi 0, %s121
      %s136 = sphi 0, %s122
      %s140 = sphi 0, %s140
      %s142 = sphi 0, %s140
      %s143 = sphi 0, %s142
      %s157 = sphi 0, %s143
      %s161 = sphi 0, %s161
      %s163 = sphi 0, %s161
      %s164 = sphi 0, %s163
      %s178 = sphi 0, %s164
      %s184 = sphi 0, %s186
      %s187 = sphi 0, %s184
      %s188 = sphi 0, %s187
      %s204 = sphi 0, %s188
    $region4: #{tpu_custom_call.1} parent=1 // loop_header_branch
      %20 = sbr.rel (%p18) target = $region8
    $region5: #{tpu_custom_call.1} parent=1 // loop_body
      %s22 = ssub.s32 %s17, 1
      %s23 = ssub.s32 %s17, 2
      %s24 = sadd.s32 %s17, 1
      %s26 = sadd.s32 %s25, 1
      %p29 = scmp.eq.s32.totalorder %s17, 3
      %p30 = scmp.ne.s32.totalorder %s25, %s27
      %p31 = scmp.eq.s32.totalorder %s17, 0
      %p32 = por %p30, %p31
      %p33 = scmp.ne.s32.totalorder %s25, %s27
      %p34 = scmp.eq.s32.totalorder %s22, 3
      %p35 = por %p33, %p34
      %p36 = scmp.ne.s32.totalorder %s27, %s28
      %p37 = scmp.eq.s32.totalorder %s22, 0
      %p38 = por %p36, %p37
      %p39 = scmp.ne.s32.totalorder %s27, %s28
      %p40 = scmp.eq.s32.totalorder %s23, 3
      %p41 = por %p39, %p40
      %p43 = scmp.ne.s32.totalorder %s28, %s42
      %p44 = scmp.eq.s32.totalorder %s23, 0
      %p45 = por %p43, %p44
      %s46 = ssub.s32 %s17, %s24
      %p47 = scmp.eq.s32.totalorder %s46, 0
      %s49 = sadd.s32 %s48, 1
      %s50 = scalar_select %p47, %s48, %s49
      %p53 = pneg %p47
      %p54 = scmp.eq.s32.totalorder %s17, 3
      %p55 = por %p53, %p54
      %p56 = scmp.ne.s32.totalorder %s48, %s51
      %p57 = scmp.eq.s32.totalorder %s17, 0
      %p58 = por %p56, %p57
      %p59 = scmp.ne.s32.totalorder %s48, %s51
      %p60 = scmp.eq.s32.totalorder %s22, 3
      %p61 = por %p59, %p60
      %p62 = scmp.ne.s32.totalorder %s51, %s52
      %p63 = scmp.eq.s32.totalorder %s22, 0
      %p64 = por %p62, %p63
      %p65 = scmp.ne.s32.totalorder %s51, %s52
      %p66 = scmp.eq.s32.totalorder %s23, 3
      %p67 = por %p65, %p66
      %p69 = scmp.ne.s32.totalorder %s52, %s68
      %p70 = scmp.eq.s32.totalorder %s23, 0
      %p71 = por %p69, %p70
      %s72 = ssub.s32 %s17, %s24
      %p73 = scmp.eq.s32.totalorder %s72, 0
      %s75 = sadd.s32 %s74, 1
      %s76 = scalar_select %p73, %s74, %s75
      %p79 = pneg %p73
      %p80 = scmp.eq.s32.totalorder %s17, 3
      %p81 = por %p79, %p80
      %p82 = scmp.ne.s32.totalorder %s74, %s77
      %p83 = scmp.eq.s32.totalorder %s17, 0
      %p84 = por %p82, %p83
      %p85 = scmp.ne.s32.totalorder %s74, %s77
      %p86 = scmp.eq.s32.totalorder %s22, 3
      %p87 = por %p85, %p86
      %p88 = scmp.ne.s32.totalorder %s77, %s78
      %p89 = scmp.eq.s32.totalorder %s22, 0
      %p90 = por %p88, %p89
      %p91 = scmp.ne.s32.totalorder %s77, %s78
      %p92 = scmp.eq.s32.totalorder %s23, 3
      %p93 = por %p91, %p92
      %p95 = scmp.ne.s32.totalorder %s78, %s94
      %p96 = scmp.eq.s32.totalorder %s23, 0
      %p97 = por %p95, %p96
      %s99 = sadd.s32 %s98, 1
      %p102 = scmp.eq.s32.totalorder %s17, 3
      %p103 = scmp.ne.s32.totalorder %s98, %s100
      %p104 = scmp.eq.s32.totalorder %s17, 0
      %p105 = por %p103, %p104
      %p106 = scmp.ne.s32.totalorder %s98, %s100
      %p107 = scmp.eq.s32.totalorder %s22, 3
      %p108 = por %p106, %p107
      %p109 = scmp.ne.s32.totalorder %s100, %s101
      %p110 = scmp.eq.s32.totalorder %s22, 0
      %p111 = por %p109, %p110
      %p112 = scmp.ne.s32.totalorder %s100, %s101
      %p113 = scmp.eq.s32.totalorder %s23, 3
      %p114 = por %p112, %p113
      %p116 = scmp.ne.s32.totalorder %s101, %s115
      %p117 = scmp.eq.s32.totalorder %s23, 0
      %p118 = por %p116, %p117
      %s120 = sadd.s32 %s119, 1
      %p123 = scmp.eq.s32.totalorder %s17, 3
      %p124 = scmp.ne.s32.totalorder %s119, %s121
      %p125 = scmp.eq.s32.totalorder %s17, 0
      %p126 = por %p124, %p125
      %p127 = scmp.ne.s32.totalorder %s119, %s121
      %p128 = scmp.eq.s32.totalorder %s22, 3
      %p129 = por %p127, %p128
      %p130 = scmp.ne.s32.totalorder %s121, %s122
      %p131 = scmp.eq.s32.totalorder %s22, 0
      %p132 = por %p130, %p131
      %p133 = scmp.ne.s32.totalorder %s121, %s122
      %p134 = scmp.eq.s32.totalorder %s23, 3
      %p135 = por %p133, %p134
      %p137 = scmp.ne.s32.totalorder %s122, %s136
      %p138 = scmp.eq.s32.totalorder %s23, 0
      %p139 = por %p137, %p138
      %s141 = sadd.s32 %s140, 1
      %p144 = scmp.eq.s32.totalorder %s17, 3
      %p145 = scmp.ne.s32.totalorder %s140, %s142
      %p146 = scmp.eq.s32.totalorder %s17, 0
      %p147 = por %p145, %p146
      %p148 = scmp.ne.s32.totalorder %s140, %s142
      %p149 = scmp.eq.s32.totalorder %s22, 3
      %p150 = por %p148, %p149
      %p151 = scmp.ne.s32.totalorder %s142, %s143
      %p152 = scmp.eq.s32.totalorder %s22, 0
      %p153 = por %p151, %p152
      %p154 = scmp.ne.s32.totalorder %s142, %s143
      %p155 = scmp.eq.s32.totalorder %s23, 3
      %p156 = por %p154, %p155
      %p158 = scmp.ne.s32.totalorder %s143, %s157
      %p159 = scmp.eq.s32.totalorder %s23, 0
      %p160 = por %p158, %p159
      %s162 = sadd.s32 %s161, 1
      %p165 = scmp.eq.s32.totalorder %s17, 3
      %p166 = scmp.ne.s32.totalorder %s161, %s163
      %p167 = scmp.eq.s32.totalorder %s17, 0
      %p168 = por %p166, %p167
      %p169 = scmp.ne.s32.totalorder %s161, %s163
      %p170 = scmp.eq.s32.totalorder %s22, 3
      %p171 = por %p169, %p170
      %p172 = scmp.ne.s32.totalorder %s163, %s164
      %p173 = scmp.eq.s32.totalorder %s22, 0
      %p174 = por %p172, %p173
      %p175 = scmp.ne.s32.totalorder %s163, %s164
      %p176 = scmp.eq.s32.totalorder %s23, 3
      %p177 = por %p175, %p176
      %p179 = scmp.ne.s32.totalorder %s164, %s178
      %p180 = scmp.eq.s32.totalorder %s23, 0
      %p181 = por %p179, %p180
      %s182 = ssub.s32 %s17, %s24
      %p183 = scmp.eq.s32.totalorder %s182, 0
      %s185 = sadd.s32 %s184, 1
      %s186 = scalar_select %p183, %s184, %s185
      %p189 = pneg %p183
      %p190 = scmp.eq.s32.totalorder %s17, 3
      %p191 = por %p189, %p190
      %p192 = scmp.ne.s32.totalorder %s184, %s187
      %p193 = scmp.eq.s32.totalorder %s17, 0
      %p194 = por %p192, %p193
      %p195 = scmp.ne.s32.totalorder %s184, %s187
      %p196 = scmp.eq.s32.totalorder %s22, 3
      %p197 = por %p195, %p196
      %p198 = scmp.ne.s32.totalorder %s187, %s188
      %p199 = scmp.eq.s32.totalorder %s22, 0
      %p200 = por %p198, %p199
      %p201 = scmp.ne.s32.totalorder %s187, %s188
      %p202 = scmp.eq.s32.totalorder %s23, 3
      %p203 = por %p201, %p202
      %p205 = scmp.ne.s32.totalorder %s188, %s204
      %p206 = scmp.eq.s32.totalorder %s23, 0
      %p207 = por %p205, %p206
      %p208 = scmp.le.s32.totalorder 1, %s17
      %p209 = scmp.lt.s32.totalorder %s17, 5
      %p210 = pnand %p208, %p209
      %p211 = pneg %p210
      // Predicated region
      $region9: #{tpu_custom_call.1} parent=5 // pred_check
        _
      $region10: #{tpu_custom_call.1} parent=5 // pred_check_branch
        %213 = sbr.rel (%p210) target = $region12
      $region11: #{tpu_custom_call.1} parent=5 // pred_region
        %s214 = ssub.s32 %s17, 1
        // Predicated region
        $region13: #{tpu_custom_call.1} parent=11 // pred_check
          %p215 = pneg %p38
        $region14: #{tpu_custom_call.1} parent=11 // pred_check_branch
          %217 = sbr.rel (%p215) target = $region16
        $region15: #{tpu_custom_call.1} parent=11 // pred_region
          %219 = vsyncadd [#allocation4], 0
          %s221 = sshll.u32 %s0, 4
          %s222 = int_to_ptr.vmem [resolvable:$true] %s221
          %224 = dma.vmem_to_smem %s222, 16, [#allocation2], [#allocation4]
        $region16: #{tpu_custom_call.1} parent=11 // pred_fallthru
          _
        // Predicated region
        $region17: #{tpu_custom_call.1} parent=11 // pred_check
          %p225 = pneg %p111
        $region18: #{tpu_custom_call.1} parent=11 // pred_check_branch
          %227 = sbr.rel (%p225) target = $region20
        $region19: #{tpu_custom_call.1} parent=11 // pred_region
          _
        $region20: #{tpu_custom_call.1} parent=11 // pred_fallthru
          _
        // Predicated region
        $region21: #{tpu_custom_call.1} parent=11 // pred_check
          %p228 = pneg %p132
        $region22: #{tpu_custom_call.1} parent=11 // pred_check_branch
          %230 = sbr.rel (%p228) target = $region24
        $region23: #{tpu_custom_call.1} parent=11 // pred_region
          _
        $region24: #{tpu_custom_call.1} parent=11 // pred_fallthru
          _
        // Predicated region
        $region25: #{tpu_custom_call.1} parent=11 // pred_check
          %p231 = pneg %p153
        $region26: #{tpu_custom_call.1} parent=11 // pred_check_branch
          %233 = sbr.rel (%p231) target = $region28
        $region27: #{tpu_custom_call.1} parent=11 // pred_region
          _
        $region28: #{tpu_custom_call.1} parent=11 // pred_fallthru
          _
        // Predicated region
        $region29: #{tpu_custom_call.1} parent=11 // pred_check
          %p234 = pneg %p174
        $region30: #{tpu_custom_call.1} parent=11 // pred_check_branch
          %236 = sbr.rel (%p234) target = $region32
        $region31: #{tpu_custom_call.1} parent=11 // pred_region
          _
        $region32: #{tpu_custom_call.1} parent=11 // pred_fallthru
          _
      $region12: #{tpu_custom_call.1} parent=5 // pred_fallthru
        _
      %p237 = scmp.lt.s32.totalorder %s17, 4
      // Predicated region
      $region33: #{tpu_custom_call.1} parent=5 // pred_check
        %p238 = pneg %p237
      $region34: #{tpu_custom_call.1} parent=5 // pred_check_branch
        %240 = sbr.rel (%p238) target = $region36
      $region35: #{tpu_custom_call.1} parent=5 // pred_region
        // Predicated region
        $region37: #{tpu_custom_call.1} parent=35 // pred_check
          %p241 = pneg %p58
        $region38: #{tpu_custom_call.1} parent=35 // pred_check_branch
          %243 = sbr.rel (%p241) target = $region40
        $region39: #{tpu_custom_call.1} parent=35 // pred_region
          %p244 = scmp.lt.s32.totalorder %s17, 3
          %s245 = scalar_select %p244, %s17, 3
          %s246 = smul.addr %s245, 2
          %s247 = smul.addr %s246, 8
          %s248 = scalar_lea.vmem %s1, %s247
        $region40: #{tpu_custom_call.1} parent=35 // pred_fallthru
          _
        // Predicated region
        $region41: #{tpu_custom_call.1} parent=35 // pred_check
          %p249 = pneg %p84
        $region42: #{tpu_custom_call.1} parent=35 // pred_check_branch
          %251 = sbr.rel (%p249) target = $region44
        $region43: #{tpu_custom_call.1} parent=35 // pred_region
          %p252 = scmp.lt.s32.totalorder %s17, 3
          %s253 = scalar_select %p252, %s17, 3
          %s254 = smul.addr %s253, 2
          %s255 = smul.addr %s254, 8
          %s256 = scalar_lea.vmem %s2, %s255
        $region44: #{tpu_custom_call.1} parent=35 // pred_fallthru
          _
      $region36: #{tpu_custom_call.1} parent=5 // pred_fallthru
        _
      %p257 = scmp.le.s32.totalorder 1, %s17
      %p258 = scmp.lt.s32.totalorder %s17, 5
      %p259 = pnand %p257, %p258
      %p260 = pneg %p259
      // Predicated region
      $region45: #{tpu_custom_call.1} parent=5 // pred_check
        _
      $region46: #{tpu_custom_call.1} parent=5 // pred_check_branch
        %262 = sbr.rel (%p259) target = $region48
      $region47: #{tpu_custom_call.1} parent=5 // pred_region
        %s263 = ssub.s32 %s17, 1
        // Predicated region
        $region49: #{tpu_custom_call.1} parent=47 // pred_check
          %p264 = pneg %p38
        $region50: #{tpu_custom_call.1} parent=47 // pred_check_branch
          %266 = sbr.rel (%p264) target = $region52
        $region51: #{tpu_custom_call.1} parent=47 // pred_region
          %268 = dma.done [#allocation4], 16
        $region52: #{tpu_custom_call.1} parent=47 // pred_fallthru
          _
        %269 = sfence
        %p270 = pneg %p38
        %p271 = pneg %p35
        %p272 = scmp.lt.s32.totalorder %s22, 3
        %s273 = scalar_select %p272, %s22, 3
        %s274 = smul.addr %s273, 2
        %s275 = smul.addr %s274, 8
        %s276 = scalar_lea.vmem %s1, %s275
        %p277 = pneg %p64
        %p278 = pneg %p61
        %p279 = scmp.lt.s32.totalorder %s22, 3
        %s280 = scalar_select %p279, %s22, 3
        %s281 = smul.addr %s280, 2
        %s282 = smul.addr %s281, 8
        %s283 = scalar_lea.vmem %s2, %s282
        %p284 = pneg %p90
        %p285 = pneg %p87
        %p286 = pneg %p111
        %p287 = pneg %p108
        %p288 = pneg %p132
        %p289 = pneg %p129
        %p290 = pneg %p153
        %p291 = pneg %p150
        %p292 = pneg %p174
        %p293 = pneg %p171
        %p294 = pneg %p200
        %p295 = pneg %p197
        %s296 = sand.u32 %s187, 1
        %s297 = scalar_lea.sflag [#allocation3], %s296
        %s298 = sand.u32 %s187, 1
        %s299 = smul.addr %s298, 16
        %s300 = scalar_lea.vmem [#allocation5], %s299
        %p301 = scmp.lt.s32.totalorder %s22, 3
        %s302 = scalar_select %p301, %s22, 3
        %s303 = smul.addr %s302, 2
        %s304 = smul.addr %s303, 8
        %s305 = scalar_lea.vmem %s1, %s304
        %p306 = scmp.lt.s32.totalorder %s22, 3
        %s307 = scalar_select %p306, %s22, 3
        %s308 = smul.addr %s307, 2
        %s309 = smul.addr %s308, 8
        %s310 = scalar_lea.vmem %s2, %s309
        %v312 = vld [vmem:[%s310] sm:$0xff]
        %v313 = vld [vmem:[%s310 + $0x8] sm:$0xff]
        %v314 = vld [vmem:[%s6] sm:$0x1]
        %v315 = vld [vmem:[%s305] sm:$0xff]
        %v316 = vld [vmem:[%s305 + $0x8] sm:$0xff]
        %v317 = vpack.c.bf16 %v316, %v315
        %v318 = vld [vmem:[%s3] sm:$0xf]
        %v319 = vld [vmem:[%s4] sm:$0x1]
        %v321 = vperm.slane %v319, 0
        %vm323 = vcmask 64512
        %v325 = vsel %vm323, %v317, 0
        %vm327 = vcmask 1043456
        %v329 = vsel %vm327, %v318, 0
        %331 = vmatpush.bf16.msra.mxu0 0
        %332 = vmatpush.bf16.msra.mxu0 0
        %333 = vmatpush.bf16.msra.mxu0 0
        %334 = vmatpush.bf16.msra.mxu0 0
        %335 = vmatpush.bf16.msra.mxu0 0
        %336 = vmatpush.bf16.msra.mxu0 0
        %337 = vmatpush.bf16.msra.mxu0 0
        %338 = vmatpush.bf16.msra.mxu0 %v329
        %339 = vmatmul.bf16.gmra.mxu0 %v325
        %v340 = vpop.f32.mrf.mxu0
        %v341 = vadd.f32 %v321, %v340
        %v342 = vpop.f32.mrf.mxu0
        %v343 = vadd.f32 %v321, %v342
        %344 = vdwg.mxu0
        %v345 = vpack.c.bf16 %v343, %v341
        %v346 = vmul.f32 %v341, %v341
        %v347 = vmul.f32 %v343, %v343
        %vm348 = vcmask 261120
        %v349 = vsel %vm348, %v346, 0.0
        %350 = vadd.xlane.f32.xlu0 %v349
        %v351 = vpop.xlane.xlu0 %350
        %v352 = vsel %vm348, %v347, 0.0
        %353 = vadd.xlane.f32.xlu0 %v352
        %v354 = vpop.xlane.xlu0 %353
        %v355 = vmax.f32 %v351, 1e-24
        %v356 = vmax.f32 %v354, 1e-24
        %v357 = vrsqrt.pop %v355
        %v358 = vmul.f32 %v357, %v355
        %v359 = vmul.f32 %v358, %v357
        %v360 = vmul.f32 0.5, %v359
        %v361 = vsub.f32 1.5, %v360
        %v362 = vmul.f32 %v357, %v361
        %vm363 = vweird.f32 %v355
        %vm364 = vweird.f32 %v357
        %vm365 = vmor %vm363, %vm364
        %v366 = vsel %vm365, %v357, %v362
        %v367 = vrsqrt.pop %v356
        %v368 = vmul.f32 %v367, %v356
        %v369 = vmul.f32 %v368, %v367
        %v370 = vmul.f32 0.5, %v369
        %v371 = vsub.f32 1.5, %v370
        %v372 = vmul.f32 %v367, %v371
        %vm373 = vweird.f32 %v356
        %vm374 = vweird.f32 %v367
        %vm375 = vmor %vm373, %vm374
        %v376 = vsel %vm375, %v367, %v372
        %v377 = vmul.f32 %v341, %v366
        %v378 = vmul.f32 %v343, %v376
        %v379 = vpack.c.bf16 %v378, %v377
        %v381 = vsel %vm348, %v379, 0
        %383 = vmatpush.bf16.xpose.msra.mxu0 0
        %384 = vmatpush.bf16.xpose.msra.mxu0 0
        %385 = vmatpush.bf16.xpose.msra.mxu0 0
        %386 = vmatpush.bf16.xpose.msra.mxu0 0
        %387 = vmatpush.bf16.xpose.msra.mxu0 0
        %388 = vmatpush.bf16.xpose.msra.mxu0 0
        %389 = vmatpush.bf16.xpose.msra.mxu0 0
        %390 = vmatpush.bf16.xpose.msra.mxu0 %v381
        %391 = vmatmul.bf16.gmra.mxu0 %v381
        %v392 = vpop.f32.mrf.mxu0
        %v393 = vadd.f32 0.0, %v392
        %v394 = vpop.f32.mrf.mxu0
        %v395 = vadd.f32 0.0, %v394
        %396 = vdwg.mxu0
        %s397 = sld [smem:[#allocation2 + $0x1]]
        %v398 = vstv %s397
        %v399 = vmul.f32 %v398, %v393
        %v400 = vmul.f32 %v398, %v395
        %v401 = vadd.f32 %v399, %v312
        %v402 = vadd.f32 %v400, %v313
        %s403 = sld [smem:[#allocation2 + $0x3]]
        %v404 = vstv %s403
        %v405 = vmul.f32 %v404, %v393
        %v406 = vmul.f32 %v404, %v395
        %v407 = vadd.f32 %v405, %v312
        %v408 = vadd.f32 %v406, %v313
        %s409 = sld [smem:[#allocation2 + $0x5]]
        %v410 = vstv %s409
        %v411 = vmul.f32 %v410, %v393
        %v412 = vmul.f32 %v410, %v395
        %v413 = vadd.f32 %v411, %v312
        %v414 = vadd.f32 %v412, %v313
        %s415 = sld [smem:[#allocation2 + $0x7]]
        %v416 = vstv %s415
        %v417 = vmul.f32 %v416, %v393
        %v418 = vmul.f32 %v416, %v395
        %v419 = vadd.f32 %v417, %v312
        %v420 = vadd.f32 %v418, %v313
        %vm421 = vcmask 130048
        %v422 = vsel %vm421, %v401, -inf
        %423 = vmax.xlane.f32.xlu0 %v422
        %v424 = vpop.xlane.xlu0 %423
        %v425 = vsel %vm421, %v402, -inf
        %426 = vmax.xlane.f32.xlu0 %v425
        %v427 = vpop.xlane.xlu0 %426
        %v428 = vsel %vm421, %v407, -inf
        %429 = vmax.xlane.f32.xlu0 %v428
        %v430 = vpop.xlane.xlu0 %429
        %v431 = vsel %vm421, %v408, -inf
        %432 = vmax.xlane.f32.xlu0 %v431
        %v433 = vpop.xlane.xlu0 %432
        %v434 = vsel %vm421, %v413, -inf
        %435 = vmax.xlane.f32.xlu0 %v434
        %v436 = vpop.xlane.xlu0 %435
        %v437 = vsel %vm421, %v414, -inf
        %438 = vmax.xlane.f32.xlu0 %v437
        %v439 = vpop.xlane.xlu0 %438
        %v440 = vsel %vm421, %v419, -inf
        %441 = vmax.xlane.f32.xlu0 %v440
        %v442 = vpop.xlane.xlu0 %441
        %v443 = vsel %vm421, %v420, -inf
        %444 = vmax.xlane.f32.xlu0 %v443
        %v445 = vpop.xlane.xlu0 %444
        %v446 = vsub.f32 %v401, %v424
        %v447 = vsub.f32 %v402, %v427
        %v448 = vsub.f32 %v407, %v430
        %v449 = vsub.f32 %v408, %v433
        %v450 = vsub.f32 %v413, %v436
        %v451 = vsub.f32 %v414, %v439
        %v452 = vsub.f32 %v419, %v442
        %v453 = vsub.f32 %v420, %v445
        %v454 = vmul.f32 %v446, 1.442695
        %v455 = vpow.pop %v454
        %v456 = vmul.f32 %v447, 1.442695
        %v457 = vpow.pop %v456
        %v458 = vmul.f32 %v448, 1.442695
        %v459 = vpow.pop %v458
        %v460 = vmul.f32 %v449, 1.442695
        %v461 = vpow.pop %v460
        %v462 = vmul.f32 %v450, 1.442695
        %v463 = vpow.pop %v462
        %v464 = vmul.f32 %v451, 1.442695
        %v465 = vpow.pop %v464
        %v466 = vmul.f32 %v452, 1.442695
        %v467 = vpow.pop %v466
        %v468 = vmul.f32 %v453, 1.442695
        %v469 = vpow.pop %v468
        %v470 = vsel %vm421, %v455, 0.0
        %471 = vadd.xlane.f32.xlu0 %v470
        %v472 = vpop.xlane.xlu0 %471
        %v473 = vsel %vm421, %v457, 0.0
        %474 = vadd.xlane.f32.xlu0 %v473
        %v475 = vpop.xlane.xlu0 %474
        %v476 = vsel %vm421, %v459, 0.0
        %477 = vadd.xlane.f32.xlu0 %v476
        %v478 = vpop.xlane.xlu0 %477
        %v479 = vsel %vm421, %v461, 0.0
        %480 = vadd.xlane.f32.xlu0 %v479
        %v481 = vpop.xlane.xlu0 %480
        %v482 = vsel %vm421, %v463, 0.0
        %483 = vadd.xlane.f32.xlu0 %v482
        %v484 = vpop.xlane.xlu0 %483
        %v485 = vsel %vm421, %v465, 0.0
        %486 = vadd.xlane.f32.xlu0 %v485
        %v487 = vpop.xlane.xlu0 %486
        %v488 = vsel %vm421, %v467, 0.0
        %489 = vadd.xlane.f32.xlu0 %v488
        %v490 = vpop.xlane.xlu0 %489
        %v491 = vsel %vm421, %v469, 0.0
        %492 = vadd.xlane.f32.xlu0 %v491
        %v493 = vpop.xlane.xlu0 %492
        %v494 = vrcp.pop %v472
        %v495 = vrcp.pop %v475
        %v496 = vrcp.pop %v478
        %v497 = vrcp.pop %v481
        %v498 = vrcp.pop %v484
        %v499 = vrcp.pop %v487
        %v500 = vrcp.pop %v490
        %v501 = vrcp.pop %v493
        %v502 = vmul.f32 %v455, %v494
        %v503 = vmul.f32 %v457, %v495
        %v504 = vmul.f32 %v459, %v496
        %v505 = vmul.f32 %v461, %v497
        %v506 = vmul.f32 %v463, %v498
        %v507 = vmul.f32 %v465, %v499
        %v508 = vmul.f32 %v467, %v500
        %v509 = vmul.f32 %v469, %v501
        %v510 = vpack.c.bf16 %v503, %v502
        %v511 = vpack.c.bf16 %v505, %v504
        %v512 = vpack.c.bf16 %v507, %v506
        %v513 = vpack.c.bf16 %v509, %v508
        %v515 = vsel %vm421, %v510, 0
        %v518 = vsel %vm421, %v511, 0
        %v521 = vsel %vm421, %v512, 0
        %v524 = vsel %vm421, %v513, 0
        %526 = vmatpush.bf16.msra.mxu0 0
        %527 = vmatpush.bf16.msra.mxu0 0
        %528 = vmatpush.bf16.msra.mxu0 0
        %529 = vmatpush.bf16.msra.mxu0 0
        %530 = vmatpush.bf16.msra.mxu0 0
        %531 = vmatpush.bf16.msra.mxu0 0
        %532 = vmatpush.bf16.msra.mxu0 0
        %533 = vmatpush.bf16.msra.mxu0 %v345
        %534 = vmatmul.bf16.gmra.mxu0 %v515
        %v535 = vpop.f32.mrf.mxu0
        %v536 = vadd.f32 0.0, %v535
        %v537 = vpop.f32.mrf.mxu0
        %v538 = vadd.f32 0.0, %v537
        %539 = vmatmul.bf16.gmra.mxu0 %v518
        %v540 = vpop.f32.mrf.mxu0
        %v541 = vadd.f32 0.0, %v540
        %v542 = vpop.f32.mrf.mxu0
        %v543 = vadd.f32 0.0, %v542
        %544 = vmatmul.bf16.gmra.mxu0 %v521
        %v545 = vpop.f32.mrf.mxu0
        %v546 = vadd.f32 0.0, %v545
        %v547 = vpop.f32.mrf.mxu0
        %v548 = vadd.f32 0.0, %v547
        %549 = vmatmul.bf16.gmra.mxu0 %v524
        %v550 = vpop.f32.mrf.mxu0
        %v551 = vadd.f32 0.0, %v550
        %v552 = vpop.f32.mrf.mxu0
        %v553 = vadd.f32 0.0, %v552
        %554 = vdwg.mxu0
        %v555 = vtanh.pop %v314
        %v557 = vperm.slane %v555, 0
        %v559 = vmul.f32 %v557, %v557
        %v560 = vsel %vm348, %v559, 0.0
        %561 = vadd.xlane.f32.xlu0 %v560
        %v562 = vpop.xlane.xlu0 %561
        %v563 = vmax.f32 %v562, 1e-24
        %v564 = vrsqrt.pop %v563
        %v565 = vmul.f32 %v564, %v563
        %v566 = vmul.f32 %v565, %v564
        %v567 = vmul.f32 0.5, %v566
        %v568 = vsub.f32 1.5, %v567
        %v569 = vmul.f32 %v564, %v568
        %vm570 = vweird.f32 %v563
        %vm571 = vweird.f32 %v564
        %vm572 = vmor %vm570, %vm571
        %v573 = vsel %vm572, %v564, %v569
        %v574 = vmul.f32 %v557, %v573
        %v575 = vpack.c.bf16 %v574, %v574
        %v577 = vsel %vm348, %v575, 0
        %579 = vmatpush.bf16.xpose.msra.mxu0 0
        %580 = vmatpush.bf16.xpose.msra.mxu0 0
        %581 = vmatpush.bf16.xpose.msra.mxu0 0
        %582 = vmatpush.bf16.xpose.msra.mxu0 0
        %583 = vmatpush.bf16.xpose.msra.mxu0 0
        %584 = vmatpush.bf16.xpose.msra.mxu0 0
        %585 = vmatpush.bf16.xpose.msra.mxu0 0
        %586 = vmatpush.bf16.xpose.msra.mxu0 %v577
        %587 = vmatmul.bf16.gmra.mxu0 %v577
        %v588 = vpop.f32.mrf.mxu0
        %v589 = vadd.f32 0.0, %v588
        %v590 = vpop.f32.mrf.mxu0
        %v591 = vadd.f32 0.0, %v590
        %592 = vdwg.mxu0
        %s593 = sld [smem:[#allocation2 + $0x2]]
        %v594 = vstv %s593
        %v595 = vmul.f32 %v594, %v589
        %v596 = vmul.f32 %v594, %v591
        %v597 = vadd.f32 %v595, %v312
        %v598 = vadd.f32 %v596, %v313
        %s599 = sld [smem:[#allocation2 + $0x4]]
        %v600 = vstv %s599
        %v601 = vmul.f32 %v600, %v589
        %v602 = vmul.f32 %v600, %v591
        %v603 = vadd.f32 %v601, %v312
        %v604 = vadd.f32 %v602, %v313
        %s605 = sld [smem:[#allocation2 + $0x6]]
        %v606 = vstv %s605
        %v607 = vmul.f32 %v606, %v589
        %v608 = vmul.f32 %v606, %v591
        %v609 = vadd.f32 %v607, %v312
        %v610 = vadd.f32 %v608, %v313
        %s611 = sld [smem:[#allocation2 + $0x8]]
        %v612 = vstv %s611
        %v613 = vmul.f32 %v612, %v589
        %v614 = vmul.f32 %v612, %v591
        %v615 = vadd.f32 %v613, %v312
        %v616 = vadd.f32 %v614, %v313
        %v617 = vsel %vm421, %v597, -inf
        %618 = vmax.xlane.f32.xlu0 %v617
        %v619 = vpop.xlane.xlu0 %618
        %v620 = vsel %vm421, %v598, -inf
        %621 = vmax.xlane.f32.xlu0 %v620
        %v622 = vpop.xlane.xlu0 %621
        %v623 = vsel %vm421, %v603, -inf
        %624 = vmax.xlane.f32.xlu0 %v623
        %v625 = vpop.xlane.xlu0 %624
        %v626 = vsel %vm421, %v604, -inf
        %627 = vmax.xlane.f32.xlu0 %v626
        %v628 = vpop.xlane.xlu0 %627
        %v629 = vsel %vm421, %v609, -inf
        %630 = vmax.xlane.f32.xlu0 %v629
        %v631 = vpop.xlane.xlu0 %630
        %v632 = vsel %vm421, %v610, -inf
        %633 = vmax.xlane.f32.xlu0 %v632
        %v634 = vpop.xlane.xlu0 %633
        %v635 = vsel %vm421, %v615, -inf
        %636 = vmax.xlane.f32.xlu0 %v635
        %v637 = vpop.xlane.xlu0 %636
        %v638 = vsel %vm421, %v616, -inf
        %639 = vmax.xlane.f32.xlu0 %v638
        %v640 = vpop.xlane.xlu0 %639
        %v641 = vsub.f32 %v597, %v619
        %v642 = vsub.f32 %v598, %v622
        %v643 = vsub.f32 %v603, %v625
        %v644 = vsub.f32 %v604, %v628
        %v645 = vsub.f32 %v609, %v631
        %v646 = vsub.f32 %v610, %v634
        %v647 = vsub.f32 %v615, %v637
        %v648 = vsub.f32 %v616, %v640
        %v649 = vmul.f32 %v641, 1.442695
        %v650 = vpow.pop %v649
        %v651 = vmul.f32 %v642, 1.442695
        %v652 = vpow.pop %v651
        %v653 = vmul.f32 %v643, 1.442695
        %v654 = vpow.pop %v653
        %v655 = vmul.f32 %v644, 1.442695
        %v656 = vpow.pop %v655
        %v657 = vmul.f32 %v645, 1.442695
        %v658 = vpow.pop %v657
        %v659 = vmul.f32 %v646, 1.442695
        %v660 = vpow.pop %v659
        %v661 = vmul.f32 %v647, 1.442695
        %v662 = vpow.pop %v661
        %v663 = vmul.f32 %v648, 1.442695
        %v664 = vpow.pop %v663
        %v665 = vsel %vm421, %v650, 0.0
        %666 = vadd.xlane.f32.xlu0 %v665
        %v667 = vpop.xlane.xlu0 %666
        %v668 = vsel %vm421, %v652, 0.0
        %669 = vadd.xlane.f32.xlu0 %v668
        %v670 = vpop.xlane.xlu0 %669
        %v671 = vsel %vm421, %v654, 0.0
        %672 = vadd.xlane.f32.xlu0 %v671
        %v673 = vpop.xlane.xlu0 %672
        %v674 = vsel %vm421, %v656, 0.0
        %675 = vadd.xlane.f32.xlu0 %v674
        %v676 = vpop.xlane.xlu0 %675
        %v677 = vsel %vm421, %v658, 0.0
        %678 = vadd.xlane.f32.xlu0 %v677
        %v679 = vpop.xlane.xlu0 %678
        %v680 = vsel %vm421, %v660, 0.0
        %681 = vadd.xlane.f32.xlu0 %v680
        %v682 = vpop.xlane.xlu0 %681
        %v683 = vsel %vm421, %v662, 0.0
        %684 = vadd.xlane.f32.xlu0 %v683
        %v685 = vpop.xlane.xlu0 %684
        %v686 = vsel %vm421, %v664, 0.0
        %687 = vadd.xlane.f32.xlu0 %v686
        %v688 = vpop.xlane.xlu0 %687
        %v689 = vrcp.pop %v667
        %v690 = vrcp.pop %v670
        %v691 = vrcp.pop %v673
        %v692 = vrcp.pop %v676
        %v693 = vrcp.pop %v679
        %v694 = vrcp.pop %v682
        %v695 = vrcp.pop %v685
        %v696 = vrcp.pop %v688
        %v697 = vmul.f32 %v650, %v689
        %v698 = vmul.f32 %v652, %v690
        %v699 = vmul.f32 %v654, %v691
        %v700 = vmul.f32 %v656, %v692
        %v701 = vmul.f32 %v658, %v693
        %v702 = vmul.f32 %v660, %v694
        %v703 = vmul.f32 %v662, %v695
        %v704 = vmul.f32 %v664, %v696
        %v705 = vpack.c.bf16 %v698, %v697
        %v706 = vpack.c.bf16 %v700, %v699
        %v707 = vpack.c.bf16 %v702, %v701
        %v708 = vpack.c.bf16 %v704, %v703
        %v709 = vpack.c.bf16 %v557, %v557
        %v711 = vsel %vm421, %v705, 0
        %v714 = vsel %vm421, %v706, 0
        %v717 = vsel %vm421, %v707, 0
        %v720 = vsel %vm421, %v708, 0
        %722 = vmatpush.bf16.msra.mxu0 0
        %723 = vmatpush.bf16.msra.mxu0 0
        %724 = vmatpush.bf16.msra.mxu0 0
        %725 = vmatpush.bf16.msra.mxu0 0
        %726 = vmatpush.bf16.msra.mxu0 0
        %727 = vmatpush.bf16.msra.mxu0 0
        %728 = vmatpush.bf16.msra.mxu0 0
        %729 = vmatpush.bf16.msra.mxu0 %v709
        %730 = vmatmul.bf16.gmra.mxu0 %v711
        %v731 = vpop.f32.mrf.mxu0
        %v732 = vpop.f32.mrf.mxu0
        %733 = vmatmul.bf16.gmra.mxu0 %v714
        %v734 = vpop.f32.mrf.mxu0
        %v735 = vadd.f32 0.0, %v734
        %v736 = vpop.f32.mrf.mxu0
        %v737 = vadd.f32 0.0, %v736
        %738 = vmatmul.bf16.gmra.mxu0 %v717
        %v739 = vpop.f32.mrf.mxu0
        %v740 = vadd.f32 0.0, %v739
        %v741 = vpop.f32.mrf.mxu0
        %v742 = vadd.f32 0.0, %v741
        %743 = vmatmul.bf16.gmra.mxu0 %v720
        %v744 = vpop.f32.mrf.mxu0
        %v745 = vadd.f32 0.0, %v744
        %v746 = vpop.f32.mrf.mxu0
        %v747 = vadd.f32 0.0, %v746
        %748 = vdwg.mxu0
        %v749 = vadd.f32 %v541, %v735
        %v750 = vadd.f32 %v543, %v737
        %v751 = vadd.f32 %v546, %v740
        %v752 = vadd.f32 %v548, %v742
        %v753 = vadd.f32 %v551, %v745
        %v754 = vadd.f32 %v553, %v747
        %v755 = vxor.u32 %v749, 2147483648
        %v756 = vxor.u32 %v750, 2147483648
        %v757 = vmul.f32 %v755, 1.442695
        %v758 = vpow.pop %v757
        %v759 = vmul.f32 %v756, 1.442695
        %v760 = vpow.pop %v759
        %v761 = vadd.f32 %v758, 1.0
        %v762 = vadd.f32 %v760, 1.0
        %v763 = vrcp.pop %v761
        %v764 = vmul.f32 %v761, %v763
        %v765 = vsub.f32 1.0, %v764
        %v766 = vmul.f32 %v763, %v765
        %v767 = vadd.f32 %v763, %v766
        %vm768 = vweird.f32 %v761
        %vm769 = vweird.f32 %v763
        %vm770 = vmor %vm768, %vm769
        %v771 = vsel %vm770, %v763, %v767
        %v772 = vand.u32 2147483647, %v761
        %vm773 = vcmp.eq.f32.partialorder %v772, 8.507059e+37
        %v774 = vand.u32 %v761, 2147483648
        %v775 = vor.u32 1.1754944e-38, %v774
        %v776 = vsel %vm773, %v775, %v771
        %v777 = vmul.f32 1.0, %v776
        %v778 = vrcp.pop %v762
        %v779 = vmul.f32 %v762, %v778
        %v780 = vsub.f32 1.0, %v779
        %v781 = vmul.f32 %v778, %v780
        %v782 = vadd.f32 %v778, %v781
        %vm783 = vweird.f32 %v762
        %vm784 = vweird.f32 %v778
        %vm785 = vmor %vm783, %vm784
        %v786 = vsel %vm785, %v778, %v782
        %v787 = vand.u32 2147483647, %v762
        %vm788 = vcmp.eq.f32.partialorder %v787, 8.507059e+37
        %v789 = vand.u32 %v762, 2147483648
        %v790 = vor.u32 1.1754944e-38, %v789
        %v791 = vsel %vm788, %v790, %v786
        %v792 = vmul.f32 1.0, %v791
        %v793 = vtanh.pop %v751
        %v794 = vtanh.pop %v752
        %v795 = vxor.u32 %v753, 2147483648
        %v796 = vxor.u32 %v754, 2147483648
        %v797 = vmul.f32 %v795, 1.442695
        %v798 = vpow.pop %v797
        %v799 = vmul.f32 %v796, 1.442695
        %v800 = vpow.pop %v799
        %v801 = vadd.f32 %v798, 1.0
        %v802 = vadd.f32 %v800, 1.0
        %v803 = vrcp.pop %v801
        %v804 = vmul.f32 %v801, %v803
        %v805 = vsub.f32 1.0, %v804
        %v806 = vmul.f32 %v803, %v805
        %v807 = vadd.f32 %v803, %v806
        %vm808 = vweird.f32 %v801
        %vm809 = vweird.f32 %v803
        %vm810 = vmor %vm808, %vm809
        %v811 = vsel %vm810, %v803, %v807
        %v812 = vand.u32 2147483647, %v801
        %vm813 = vcmp.eq.f32.partialorder %v812, 8.507059e+37
        %v814 = vand.u32 %v801, 2147483648
        %v815 = vor.u32 1.1754944e-38, %v814
        %v816 = vsel %vm813, %v815, %v811
        %v817 = vmul.f32 1.0, %v816
        %v818 = vrcp.pop %v802
        %v819 = vmul.f32 %v802, %v818
        %v820 = vsub.f32 1.0, %v819
        %v821 = vmul.f32 %v818, %v820
        %v822 = vadd.f32 %v818, %v821
        %vm823 = vweird.f32 %v802
        %vm824 = vweird.f32 %v818
        %vm825 = vmor %vm823, %vm824
        %v826 = vsel %vm825, %v818, %v822
        %v827 = vand.u32 2147483647, %v802
        %vm828 = vcmp.eq.f32.partialorder %v827, 8.507059e+37
        %v829 = vand.u32 %v802, 2147483648
        %v830 = vor.u32 1.1754944e-38, %v829
        %v831 = vsel %vm828, %v830, %v826
        %v832 = vmul.f32 1.0, %v831
        %v833 = vmul.f32 %v777, %v793
        %v834 = vmul.f32 %v792, %v794
        %v835 = vtanh.pop %v833
        %v836 = vtanh.pop %v834
        %v837 = vmul.f32 %v817, %v835
        %v838 = vmul.f32 %v832, %v836
        %v839 = vmul.f32 %v837, %v837
        %v840 = vmul.f32 %v838, %v838
        %v841 = vsel %vm348, %v839, 0.0
        %842 = vadd.xlane.f32.xlu0 %v841
        %v843 = vpop.xlane.xlu0 %842
        %v844 = vsel %vm348, %v840, 0.0
        %845 = vadd.xlane.f32.xlu0 %v844
        %v846 = vpop.xlane.xlu0 %845
        %v847 = vmax.f32 %v843, 1e-24
        %v848 = vmax.f32 %v846, 1e-24
        %v849 = vrsqrt.pop %v847
        %v850 = vmul.f32 %v849, %v847
        %v851 = vmul.f32 %v850, %v849
        %v852 = vmul.f32 0.5, %v851
        %v853 = vsub.f32 1.5, %v852
        %v854 = vmul.f32 %v849, %v853
        %vm855 = vweird.f32 %v847
        %vm856 = vweird.f32 %v849
        %vm857 = vmor %vm855, %vm856
        %v858 = vsel %vm857, %v849, %v854
        %v859 = vrsqrt.pop %v848
        %v860 = vmul.f32 %v859, %v848
        %v861 = vmul.f32 %v860, %v859
        %v862 = vmul.f32 0.5, %v861
        %v863 = vsub.f32 1.5, %v862
        %v864 = vmul.f32 %v859, %v863
        %vm865 = vweird.f32 %v848
        %vm866 = vweird.f32 %v859
        %vm867 = vmor %vm865, %vm866
        %v868 = vsel %vm867, %v859, %v864
        %v869 = vmul.f32 %v837, %v858
        %v870 = vmul.f32 %v838, %v868
        %v871 = vpack.c.bf16 %v870, %v869
        %v873 = vsel %vm348, %v871, 0
        %875 = vmatpush.bf16.xpose.msra.mxu0 0
        %876 = vmatpush.bf16.xpose.msra.mxu0 0
        %877 = vmatpush.bf16.xpose.msra.mxu0 0
        %878 = vmatpush.bf16.xpose.msra.mxu0 0
        %879 = vmatpush.bf16.xpose.msra.mxu0 0
        %880 = vmatpush.bf16.xpose.msra.mxu0 0
        %881 = vmatpush.bf16.xpose.msra.mxu0 0
        %882 = vmatpush.bf16.xpose.msra.mxu0 %v873
        %883 = vmatmul.bf16.gmra.mxu0 %v873
        %v884 = vpop.f32.mrf.mxu0
        %v885 = vadd.f32 0.0, %v884
        %v886 = vpop.f32.mrf.mxu0
        %v887 = vadd.f32 0.0, %v886
        %888 = vdwg.mxu0
        %s889 = sld [smem:[#allocation2]]
        %v890 = vstv %s889
        %v891 = vmul.f32 %v890, %v885
        %v892 = vmul.f32 %v890, %v887
        %v893 = vadd.f32 %v891, %v312
        %v894 = vadd.f32 %v892, %v313
        %v895 = vsel %vm421, %v893, -inf
        %896 = vmax.xlane.f32.xlu0 %v895
        %v897 = vpop.xlane.xlu0 %896
        %v898 = vsel %vm421, %v894, -inf
        %899 = vmax.xlane.f32.xlu0 %v898
        %v900 = vpop.xlane.xlu0 %899
        %v901 = vsub.f32 %v893, %v897
        %v902 = vsub.f32 %v894, %v900
        %v903 = vmul.f32 %v901, 1.442695
        %v904 = vpow.pop %v903
        %v905 = vmul.f32 %v902, 1.442695
        %v906 = vpow.pop %v905
        %v907 = vsel %vm421, %v904, 0.0
        %908 = vadd.xlane.f32.xlu0 %v907
        %v909 = vpop.xlane.xlu0 %908
        %v910 = vsel %vm421, %v906, 0.0
        %911 = vadd.xlane.f32.xlu0 %v910
        %v912 = vpop.xlane.xlu0 %911
        %v913 = vrcp.pop %v909
        %v914 = vrcp.pop %v912
        %v915 = vmul.f32 %v904, %v913
        %v916 = vmul.f32 %v906, %v914
        %v917 = vpack.c.bf16 %v916, %v915
        %v918 = vpack.c.bf16 %v838, %v837
        %v920 = vsel %vm421, %v917, 0
        %922 = vmatpush.bf16.msra.mxu0 0
        %923 = vmatpush.bf16.msra.mxu0 0
        %924 = vmatpush.bf16.msra.mxu0 0
        %925 = vmatpush.bf16.msra.mxu0 0
        %926 = vmatpush.bf16.msra.mxu0 0
        %927 = vmatpush.bf16.msra.mxu0 0
        %928 = vmatpush.bf16.msra.mxu0 0
        %929 = vmatpush.bf16.msra.mxu0 %v918
        %930 = vmatmul.bf16.gmra.mxu0 %v920
        %v931 = vpop.f32.mrf.mxu0
        %v932 = vadd.f32 0.0, %v931
        %v933 = vpop.f32.mrf.mxu0
        %v934 = vadd.f32 0.0, %v933
        %935 = vdwg.mxu0
        %938 = vrot.lane.b32.xlu0 %v932, 32
        %v939 = vpop.permute.xlu0 %938
        %940 = vrot.lane.b32.xlu0 %v934, 32
        %v941 = vpop.permute.xlu0 %940
        %v944 = vsel %vm348, %v837, %v939
        %v945 = vsel %vm348, %v838, %v941
        %v946 = vpack.c.bf16 %v945, %v944
        %v947 = vld [vmem:[%s5] sm:$0xf]
        %v948 = vld [vmem:[%s5 + $0x4] sm:$0xf]
        %v949 = vld [vmem:[%s5 + $0x8] sm:$0xf]
        %v950 = vld [vmem:[%s5 + $0xc] sm:$0xf]
        %v951 = vld [vmem:[%s5 + $0x10] sm:$0xf]
        %v952 = vld [vmem:[%s5 + $0x14] sm:$0xf]
        %v953 = vld [vmem:[%s5 + $0x18] sm:$0xf]
        %v954 = vld [vmem:[%s5 + $0x1c] sm:$0xf]
        %v956 = vperm.slane %v314, 0
        %v966 = vunpack.c.l.b16 %v947
        %v967 = vunpack.c.l.b16 %v948
        %v968 = vunpack.c.l.b16 %v949
        %v969 = vunpack.c.l.b16 %v950
        %v970 = vunpack.c.l.b16 %v951
        %v971 = vunpack.c.l.b16 %v952
        %v972 = vunpack.c.l.b16 %v953
        %v973 = vunpack.c.l.b16 %v954
        %v974 = vpack.c.b16 %v967, %v966
        %v975 = vpack.c.b16 %v969, %v968
        %v976 = vpack.c.b16 %v971, %v970
        %v977 = vpack.c.b16 %v973, %v972
        %vm982 = vcmask 523264
        %v984 = vsel %vm982, %v946, 0
        %986 = vmatpush.bf16.msra.mxu0 0
        %987 = vmatpush.bf16.msra.mxu0 0
        %988 = vmatpush.bf16.msra.mxu0 0
        %989 = vmatpush.bf16.msra.mxu0 0
        %990 = vmatpush.bf16.msra.mxu0 %v977
        %991 = vmatpush.bf16.msra.mxu0 %v976
        %992 = vmatpush.bf16.msra.mxu0 %v975
        %993 = vmatpush.bf16.msra.mxu0 %v974
        %994 = vmatmul.bf16.gmra.mxu0 %v984
        %v995 = vpop.f32.mrf.mxu0
        %v996 = vadd.f32 %v956, %v995
        %v997 = vpop.f32.mrf.mxu0
        %v998 = vadd.f32 %v956, %v997
        %999 = vdwg.mxu0
        %v1000 = vtanh.pop %v996
        %v1001 = vtanh.pop %v998
        %v1002 = vadd.f32 %v837, %v1000
        %v1003 = vadd.f32 %v838, %v1001
        %v1004 = vmul.f32 %v1002, %v1002
        %v1005 = vmul.f32 %v1003, %v1003
        %v1006 = vsel %vm348, %v1004, 0.0
        %1007 = vadd.xlane.f32.xlu0 %v1006
        %v1008 = vpop.xlane.xlu0 %1007
        %v1009 = vsel %vm348, %v1005, 0.0
        %1010 = vadd.xlane.f32.xlu0 %v1009
        %v1011 = vpop.xlane.xlu0 %1010
        %v1012 = vmax.f32 %v1008, 1e-24
        %v1013 = vmax.f32 %v1011, 1e-24
        %v1014 = vrsqrt.pop %v1012
        %v1015 = vmul.f32 %v1014, %v1012
        %v1016 = vmul.f32 %v1015, %v1014
        %v1017 = vmul.f32 0.5, %v1016
        %v1018 = vsub.f32 1.5, %v1017
        %v1019 = vmul.f32 %v1014, %v1018
        %vm1020 = vweird.f32 %v1012
        %vm1021 = vweird.f32 %v1014
        %vm1022 = vmor %vm1020, %vm1021
        %v1023 = vsel %vm1022, %v1014, %v1019
        %v1024 = vrsqrt.pop %v1013
        %v1025 = vmul.f32 %v1024, %v1013
        %v1026 = vmul.f32 %v1025, %v1024
        %v1027 = vmul.f32 0.5, %v1026
        %v1028 = vsub.f32 1.5, %v1027
        %v1029 = vmul.f32 %v1024, %v1028
        %vm1030 = vweird.f32 %v1013
        %vm1031 = vweird.f32 %v1024
        %vm1032 = vmor %vm1030, %vm1031
        %v1033 = vsel %vm1032, %v1024, %v1029
        %v1034 = vmul.f32 %v1002, %v1023
        %v1035 = vmul.f32 %v1003, %v1033
        %v1036 = vpack.c.bf16 %v1035, %v1034
        %v1038 = vsel %vm348, %v1036, 0
        %1040 = vmatpush.bf16.xpose.msra.mxu0 0
        %1041 = vmatpush.bf16.xpose.msra.mxu0 0
        %1042 = vmatpush.bf16.xpose.msra.mxu0 0
        %1043 = vmatpush.bf16.xpose.msra.mxu0 0
        %1044 = vmatpush.bf16.xpose.msra.mxu0 0
        %1045 = vmatpush.bf16.xpose.msra.mxu0 0
        %1046 = vmatpush.bf16.xpose.msra.mxu0 0
        %1047 = vmatpush.bf16.xpose.msra.mxu0 %v1038
        %1048 = vmatmul.bf16.gmra.mxu0 %v1038
        %v1049 = vpop.f32.mrf.mxu0
        %v1050 = vadd.f32 0.0, %v1049
        %v1051 = vpop.f32.mrf.mxu0
        %v1052 = vadd.f32 0.0, %v1051
        %1053 = vdwg.mxu0
        %v1054 = vmul.f32 %v594, %v1050
        %v1055 = vmul.f32 %v594, %v1052
        %v1056 = vadd.f32 %v1054, %v312
        %v1057 = vadd.f32 %v1055, %v313
        %v1058 = vmul.f32 %v600, %v1050
        %v1059 = vmul.f32 %v600, %v1052
        %v1060 = vadd.f32 %v1058, %v312
        %v1061 = vadd.f32 %v1059, %v313
        %v1062 = vmul.f32 %v606, %v1050
        %v1063 = vmul.f32 %v606, %v1052
        %v1064 = vadd.f32 %v1062, %v312
        %v1065 = vadd.f32 %v1063, %v313
        %v1066 = vmul.f32 %v612, %v1050
        %v1067 = vmul.f32 %v612, %v1052
        %v1068 = vadd.f32 %v1066, %v312
        %v1069 = vadd.f32 %v1067, %v313
        %v1070 = vsel %vm421, %v1056, -inf
        %1071 = vmax.xlane.f32.xlu0 %v1070
        %v1072 = vpop.xlane.xlu0 %1071
        %v1073 = vsel %vm421, %v1057, -inf
        %1074 = vmax.xlane.f32.xlu0 %v1073
        %v1075 = vpop.xlane.xlu0 %1074
        %v1076 = vsel %vm421, %v1060, -inf
        %1077 = vmax.xlane.f32.xlu0 %v1076
        %v1078 = vpop.xlane.xlu0 %1077
        %v1079 = vsel %vm421, %v1061, -inf
        %1080 = vmax.xlane.f32.xlu0 %v1079
        %v1081 = vpop.xlane.xlu0 %1080
        %v1082 = vsel %vm421, %v1064, -inf
        %1083 = vmax.xlane.f32.xlu0 %v1082
        %v1084 = vpop.xlane.xlu0 %1083
        %v1085 = vsel %vm421, %v1065, -inf
        %1086 = vmax.xlane.f32.xlu0 %v1085
        %v1087 = vpop.xlane.xlu0 %1086
        %v1088 = vsel %vm421, %v1068, -inf
        %1089 = vmax.xlane.f32.xlu0 %v1088
        %v1090 = vpop.xlane.xlu0 %1089
        %v1091 = vsel %vm421, %v1069, -inf
        %1092 = vmax.xlane.f32.xlu0 %v1091
        %v1093 = vpop.xlane.xlu0 %1092
        %v1094 = vsub.f32 %v1056, %v1072
        %v1095 = vsub.f32 %v1057, %v1075
        %v1096 = vsub.f32 %v1060, %v1078
        %v1097 = vsub.f32 %v1061, %v1081
        %v1098 = vsub.f32 %v1064, %v1084
        %v1099 = vsub.f32 %v1065, %v1087
        %v1100 = vsub.f32 %v1068, %v1090
        %v1101 = vsub.f32 %v1069, %v1093
        %v1102 = vmul.f32 %v1094, 1.442695
        %v1103 = vpow.pop %v1102
        %v1104 = vmul.f32 %v1095, 1.442695
        %v1105 = vpow.pop %v1104
        %v1106 = vmul.f32 %v1096, 1.442695
        %v1107 = vpow.pop %v1106
        %v1108 = vmul.f32 %v1097, 1.442695
        %v1109 = vpow.pop %v1108
        %v1110 = vmul.f32 %v1098, 1.442695
        %v1111 = vpow.pop %v1110
        %v1112 = vmul.f32 %v1099, 1.442695
        %v1113 = vpow.pop %v1112
        %v1114 = vmul.f32 %v1100, 1.442695
        %v1115 = vpow.pop %v1114
        %v1116 = vmul.f32 %v1101, 1.442695
        %v1117 = vpow.pop %v1116
        %v1118 = vsel %vm421, %v1103, 0.0
        %1119 = vadd.xlane.f32.xlu0 %v1118
        %v1120 = vpop.xlane.xlu0 %1119
        %v1121 = vsel %vm421, %v1105, 0.0
        %1122 = vadd.xlane.f32.xlu0 %v1121
        %v1123 = vpop.xlane.xlu0 %1122
        %v1124 = vsel %vm421, %v1107, 0.0
        %1125 = vadd.xlane.f32.xlu0 %v1124
        %v1126 = vpop.xlane.xlu0 %1125
        %v1127 = vsel %vm421, %v1109, 0.0
        %1128 = vadd.xlane.f32.xlu0 %v1127
        %v1129 = vpop.xlane.xlu0 %1128
        %v1130 = vsel %vm421, %v1111, 0.0
        %1131 = vadd.xlane.f32.xlu0 %v1130
        %v1132 = vpop.xlane.xlu0 %1131
        %v1133 = vsel %vm421, %v1113, 0.0
        %1134 = vadd.xlane.f32.xlu0 %v1133
        %v1135 = vpop.xlane.xlu0 %1134
        %v1136 = vsel %vm421, %v1115, 0.0
        %1137 = vadd.xlane.f32.xlu0 %v1136
        %v1138 = vpop.xlane.xlu0 %1137
        %v1139 = vsel %vm421, %v1117, 0.0
        %1140 = vadd.xlane.f32.xlu0 %v1139
        %v1141 = vpop.xlane.xlu0 %1140
        %v1142 = vrcp.pop %v1120
        %v1143 = vrcp.pop %v1123
        %v1144 = vrcp.pop %v1126
        %v1145 = vrcp.pop %v1129
        %v1146 = vrcp.pop %v1132
        %v1147 = vrcp.pop %v1135
        %v1148 = vrcp.pop %v1138
        %v1149 = vrcp.pop %v1141
        %v1150 = vmul.f32 %v1103, %v1142
        %v1151 = vmul.f32 %v1105, %v1143
        %v1152 = vmul.f32 %v1107, %v1144
        %v1153 = vmul.f32 %v1109, %v1145
        %v1154 = vmul.f32 %v1111, %v1146
        %v1155 = vmul.f32 %v1113, %v1147
        %v1156 = vmul.f32 %v1115, %v1148
        %v1157 = vmul.f32 %v1117, %v1149
        %v1158 = vpack.c.bf16 %v1151, %v1150
        %v1159 = vpack.c.bf16 %v1153, %v1152
        %v1160 = vpack.c.bf16 %v1155, %v1154
        %v1161 = vpack.c.bf16 %v1157, %v1156
        %v1162 = vpack.c.bf16 %v1003, %v1002
        %v1164 = vsel %vm421, %v1158, 0
        %v1167 = vsel %vm421, %v1159, 0
        %v1170 = vsel %vm421, %v1160, 0
        %v1173 = vsel %vm421, %v1161, 0
        %1175 = vmatpush.bf16.msra.mxu0 0
        %1176 = vmatpush.bf16.msra.mxu0 0
        %1177 = vmatpush.bf16.msra.mxu0 0
        %1178 = vmatpush.bf16.msra.mxu0 0
        %1179 = vmatpush.bf16.msra.mxu0 0
        %1180 = vmatpush.bf16.msra.mxu0 0
        %1181 = vmatpush.bf16.msra.mxu0 0
        %1182 = vmatpush.bf16.msra.mxu0 %v1162
        %1183 = vmatmul.bf16.gmra.mxu0 %v1164
        %v1184 = vpop.f32.mrf.mxu0
        %v1185 = vadd.f32 0.0, %v1184
        %v1186 = vpop.f32.mrf.mxu0
        %v1187 = vadd.f32 0.0, %v1186
        %1188 = vmatmul.bf16.gmra.mxu0 %v1167
        %v1189 = vpop.f32.mrf.mxu0
        %v1190 = vadd.f32 0.0, %v1189
        %v1191 = vpop.f32.mrf.mxu0
        %v1192 = vadd.f32 0.0, %v1191
        %1193 = vmatmul.bf16.gmra.mxu0 %v1170
        %v1194 = vpop.f32.mrf.mxu0
        %v1195 = vadd.f32 0.0, %v1194
        %v1196 = vpop.f32.mrf.mxu0
        %v1197 = vadd.f32 0.0, %v1196
        %1198 = vmatmul.bf16.gmra.mxu0 %v1173
        %v1199 = vpop.f32.mrf.mxu0
        %v1200 = vadd.f32 0.0, %v1199
        %v1201 = vpop.f32.mrf.mxu0
        %v1202 = vadd.f32 0.0, %v1201
        %1203 = vdwg.mxu0
        %v1204 = vadd.f32 %v536, %v1185
        %v1205 = vadd.f32 %v538, %v1187
        %v1206 = vadd.f32 %v541, %v1190
        %v1207 = vadd.f32 %v543, %v1192
        %v1208 = vadd.f32 %v546, %v1195
        %v1209 = vadd.f32 %v548, %v1197
        %v1210 = vadd.f32 %v551, %v1200
        %v1211 = vadd.f32 %v553, %v1202
        %v1212 = vxor.u32 %v1204, 2147483648
        %v1213 = vxor.u32 %v1205, 2147483648
        %v1214 = vmul.f32 %v1212, 1.442695
        %v1215 = vpow.pop %v1214
        %v1216 = vmul.f32 %v1213, 1.442695
        %v1217 = vpow.pop %v1216
        %v1218 = vadd.f32 %v1215, 1.0
        %v1219 = vadd.f32 %v1217, 1.0
        %v1220 = vrcp.pop %v1218
        %v1221 = vmul.f32 %v1218, %v1220
        %v1222 = vsub.f32 1.0, %v1221
        %v1223 = vmul.f32 %v1220, %v1222
        %v1224 = vadd.f32 %v1220, %v1223
        %vm1225 = vweird.f32 %v1218
        %vm1226 = vweird.f32 %v1220
        %vm1227 = vmor %vm1225, %vm1226
        %v1228 = vsel %vm1227, %v1220, %v1224
        %v1229 = vand.u32 2147483647, %v1218
        %vm1230 = vcmp.eq.f32.partialorder %v1229, 8.507059e+37
        %v1231 = vand.u32 %v1218, 2147483648
        %v1232 = vor.u32 1.1754944e-38, %v1231
        %v1233 = vsel %vm1230, %v1232, %v1228
        %v1234 = vmul.f32 1.0, %v1233
        %v1235 = vrcp.pop %v1219
        %v1236 = vmul.f32 %v1219, %v1235
        %v1237 = vsub.f32 1.0, %v1236
        %v1238 = vmul.f32 %v1235, %v1237
        %v1239 = vadd.f32 %v1235, %v1238
        %vm1240 = vweird.f32 %v1219
        %vm1241 = vweird.f32 %v1235
        %vm1242 = vmor %vm1240, %vm1241
        %v1243 = vsel %vm1242, %v1235, %v1239
        %v1244 = vand.u32 2147483647, %v1219
        %vm1245 = vcmp.eq.f32.partialorder %v1244, 8.507059e+37
        %v1246 = vand.u32 %v1219, 2147483648
        %v1247 = vor.u32 1.1754944e-38, %v1246
        %v1248 = vsel %vm1245, %v1247, %v1243
        %v1249 = vmul.f32 1.0, %v1248
        %v1250 = vxor.u32 %v1206, 2147483648
        %v1251 = vxor.u32 %v1207, 2147483648
        %v1252 = vmul.f32 %v1250, 1.442695
        %v1253 = vpow.pop %v1252
        %v1254 = vmul.f32 %v1251, 1.442695
        %v1255 = vpow.pop %v1254
        %v1256 = vadd.f32 %v1253, 1.0
        %v1257 = vadd.f32 %v1255, 1.0
        %v1258 = vrcp.pop %v1256
        %v1259 = vmul.f32 %v1256, %v1258
        %v1260 = vsub.f32 1.0, %v1259
        %v1261 = vmul.f32 %v1258, %v1260
        %v1262 = vadd.f32 %v1258, %v1261
        %vm1263 = vweird.f32 %v1256
        %vm1264 = vweird.f32 %v1258
        %vm1265 = vmor %vm1263, %vm1264
        %v1266 = vsel %vm1265, %v1258, %v1262
        %v1267 = vand.u32 2147483647, %v1256
        %vm1268 = vcmp.eq.f32.partialorder %v1267, 8.507059e+37
        %v1269 = vand.u32 %v1256, 2147483648
        %v1270 = vor.u32 1.1754944e-38, %v1269
        %v1271 = vsel %vm1268, %v1270, %v1266
        %v1272 = vmul.f32 1.0, %v1271
        %v1273 = vrcp.pop %v1257
        %v1274 = vmul.f32 %v1257, %v1273
        %v1275 = vsub.f32 1.0, %v1274
        %v1276 = vmul.f32 %v1273, %v1275
        %v1277 = vadd.f32 %v1273, %v1276
        %vm1278 = vweird.f32 %v1257
        %vm1279 = vweird.f32 %v1273
        %vm1280 = vmor %vm1278, %vm1279
        %v1281 = vsel %vm1280, %v1273, %v1277
        %v1282 = vand.u32 2147483647, %v1257
        %vm1283 = vcmp.eq.f32.partialorder %v1282, 8.507059e+37
        %v1284 = vand.u32 %v1257, 2147483648
        %v1285 = vor.u32 1.1754944e-38, %v1284
        %v1286 = vsel %vm1283, %v1285, %v1281
        %v1287 = vmul.f32 1.0, %v1286
        %v1288 = vtanh.pop %v1208
        %v1289 = vtanh.pop %v1209
        %v1290 = vxor.u32 %v1210, 2147483648
        %v1291 = vxor.u32 %v1211, 2147483648
        %v1292 = vmul.f32 %v1290, 1.442695
        %v1293 = vpow.pop %v1292
        %v1294 = vmul.f32 %v1291, 1.442695
        %v1295 = vpow.pop %v1294
        %v1296 = vadd.f32 %v1293, 1.0
        %v1297 = vadd.f32 %v1295, 1.0
        %v1298 = vrcp.pop %v1296
        %v1299 = vmul.f32 %v1296, %v1298
        %v1300 = vsub.f32 1.0, %v1299
        %v1301 = vmul.f32 %v1298, %v1300
        %v1302 = vadd.f32 %v1298, %v1301
        %vm1303 = vweird.f32 %v1296
        %vm1304 = vweird.f32 %v1298
        %vm1305 = vmor %vm1303, %vm1304
        %v1306 = vsel %vm1305, %v1298, %v1302
        %v1307 = vand.u32 2147483647, %v1296
        %vm1308 = vcmp.eq.f32.partialorder %v1307, 8.507059e+37
        %v1309 = vand.u32 %v1296, 2147483648
        %v1310 = vor.u32 1.1754944e-38, %v1309
        %v1311 = vsel %vm1308, %v1310, %v1306
        %v1312 = vmul.f32 1.0, %v1311
        %v1313 = vrcp.pop %v1297
        %v1314 = vmul.f32 %v1297, %v1313
        %v1315 = vsub.f32 1.0, %v1314
        %v1316 = vmul.f32 %v1313, %v1315
        %v1317 = vadd.f32 %v1313, %v1316
        %vm1318 = vweird.f32 %v1297
        %vm1319 = vweird.f32 %v1313
        %vm1320 = vmor %vm1318, %vm1319
        %v1321 = vsel %vm1320, %v1313, %v1317
        %v1322 = vand.u32 2147483647, %v1297
        %vm1323 = vcmp.eq.f32.partialorder %v1322, 8.507059e+37
        %v1324 = vand.u32 %v1297, 2147483648
        %v1325 = vor.u32 1.1754944e-38, %v1324
        %v1326 = vsel %vm1323, %v1325, %v1321
        %v1327 = vmul.f32 1.0, %v1326
        %v1328 = vmul.f32 %v1234, %v833
        %v1329 = vmul.f32 %v1249, %v834
        %v1330 = vmul.f32 %v1272, %v1288
        %v1331 = vmul.f32 %v1287, %v1289
        %v1332 = vadd.f32 %v1328, %v1330
        %v1333 = vadd.f32 %v1329, %v1331
        %v1334 = vtanh.pop %v1332
        %v1335 = vtanh.pop %v1333
        %v1336 = vmul.f32 %v1312, %v1334
        %v1337 = vmul.f32 %v1327, %v1335
        %1340 = vrot.lane.b32.xlu0 %v1332, 32
        %v1341 = vpop.permute.xlu0 %1340
        %1342 = vrot.lane.b32.xlu0 %v1333, 32
        %v1343 = vpop.permute.xlu0 %1342
        %v1346 = vsel %vm348, %v1336, %v1341
        %v1347 = vsel %vm348, %v1337, %v1343
        %1348 = vst.msk [vmem:[%s300] sm:$0xff] %vm982, %v1346
        %1349 = vst.msk [vmem:[%s300 + $0x8] sm:$0xff] %vm982, %v1347
        %s1350 = sand.u32 %s187, 1
        %s1351 = scalar_lea.sflag [#allocation3], %s1350
        %s1352 = sand.u32 %s187, 1
        %s1353 = smul.addr %s1352, 16
        %s1354 = scalar_lea.vmem [#allocation5], %s1353
        // Predicated region
        $region53: #{tpu_custom_call.1} parent=47 // pred_check
          %p1355 = pneg %p197
        $region54: #{tpu_custom_call.1} parent=47 // pred_check_branch
          %1357 = sbr.rel (%p1355) target = $region56
        $region55: #{tpu_custom_call.1} parent=47 // pred_region
          %1359 = vsyncadd %s1351, 0
          %s1360 = smul.addr %s22, 2
          %s1361 = smul.addr %s1360, 8
          %s1362 = scalar_lea.hbm %s7, %s1361
          %s1363 = sshll.u32 %s1354, 4
          %s1364 = int_to_ptr.vmem [resolvable:$true] %s1363
          %s1365 = sshll.u32 %s1362, 4
          %s1366 = int_to_ptr.hbm [resolvable:$true] %s1365
          %1371 = dma.vmem_to_hbm [thread:$0]  %s1364, 256, %s1366, %s1351, 128, 128, 8
        $region56: #{tpu_custom_call.1} parent=47 // pred_fallthru
          _
      $region48: #{tpu_custom_call.1} parent=5 // pred_fallthru
        _
      %p1372 = scmp.le.s32.totalorder 2, %s17
      // Predicated region
      $region57: #{tpu_custom_call.1} parent=5 // pred_check
        %p1373 = pneg %p1372
      $region58: #{tpu_custom_call.1} parent=5 // pred_check_branch
        %1375 = sbr.rel (%p1373) target = $region60
      $region59: #{tpu_custom_call.1} parent=5 // pred_region
        %s1376 = ssub.s32 %s17, 2
        // Predicated region
        $region61: #{tpu_custom_call.1} parent=59 // pred_check
          %p1377 = pneg %p203
        $region62: #{tpu_custom_call.1} parent=59 // pred_check_branch
          %1379 = sbr.rel (%p1377) target = $region64
        $region63: #{tpu_custom_call.1} parent=59 // pred_region
          %s1380 = sand.u32 %s188, 1
          %s1381 = scalar_lea.sflag [#allocation3], %s1380
          %s1382 = sand.u32 %s188, 1
          %s1383 = smul.addr %s1382, 16
          %s1384 = scalar_lea.vmem [#allocation5], %s1383
          %1386 = dma.done %s1381, 256
        $region64: #{tpu_custom_call.1} parent=59 // pred_fallthru
          _
      $region60: #{tpu_custom_call.1} parent=5 // pred_fallthru
        _
    $region6: #{tpu_custom_call.1} parent=1 // loop_footer
      %s21 = sadd.s32 1, %s17
    $region7: #{tpu_custom_call.1} parent=1 // loop_footer_branch
      %16 = sbr.rel target = $region3
    $region8: #{tpu_custom_call.1} parent=1 // loop_exit
      _
    %1387 = vsyncpa [#allocation3], 1
    %s1388 = scalar_lea.sflag [#allocation3], 1
    %1389 = vsyncpa %s1388, 1
    %1390 = vsyncpa [#allocation4], 1
    %s1391 = scalar_lea.sflag [#allocation4], 1
    %1392 = vsyncpa %s1391, 1

</llo_original>
